<compile_context>
chip_gen: v7x
topology: tpu7x:2x2x1
jax: 0.10.0
libtpu: 0.0.40
codegen_flags: <defaults>
</compile_context>

<pallas_src>
import functools

import jax
import jax.numpy as jnp
from jax.experimental import pallas as pl
from jax.experimental.pallas import tpu as pltpu


# ---------------------------------------------------------------------------
# Kernel 1: row-tiled linear projection  y = x @ Wt (+ b)
# ---------------------------------------------------------------------------
def _matmul_kernel(x_ref, w_ref, o_ref):
    acc = jnp.dot(x_ref[...], w_ref[...], preferred_element_type=jnp.float32)
    o_ref[...] = acc.astype(o_ref.dtype)


def _matmul_bias_kernel(x_ref, w_ref, b_ref, o_ref):
    acc = jnp.dot(x_ref[...], w_ref[...], preferred_element_type=jnp.float32)
    acc = acc + b_ref[...].astype(jnp.float32)
    o_ref[...] = acc.astype(o_ref.dtype)


def _row_tile(m, target=512):
    """Largest row tile <= target that divides m and respects the sublane rule."""
    if m <= target:
        return m
    for t in range(target - target % 8, 7, -8):
        if m % t == 0:
            return t
    return m


def linear(x2d, w, b=None, *, row_tile=512):
    """x2d: (M, K) native dtype.  w: (N, K) PyTorch Linear layout.  b: (N,) or None."""
    M, K = x2d.shape
    N = w.shape[0]
    wt = jnp.asarray(w).T                        # (K, N): out-features on the lane axis
    tm = _row_tile(M, row_tile)
    grid = (M // tm,)

    in_specs = [
        pl.BlockSpec((tm, K), lambda i: (i, 0)),
        pl.BlockSpec((K, N), lambda i: (0, 0)),
    ]
    args = [x2d, wt]
    kernel = _matmul_kernel
    if b is not None:
        in_specs.append(pl.BlockSpec((1, N), lambda i: (0, 0)))
        args.append(jnp.asarray(b).reshape(1, N))
        kernel = _matmul_bias_kernel

    return pl.pallas_call(
        kernel,
        out_shape=jax.ShapeDtypeStruct((M, N), x2d.dtype),
        grid=grid,
        in_specs=in_specs,
        out_specs=pl.BlockSpec((tm, N), lambda i: (i, 0)),
        compiler_params=pltpu.CompilerParams(
            dimension_semantics=("parallel",)),
    )(*args)


# ---------------------------------------------------------------------------
# Kernel 2: fused multi-head attention — one batch element (all heads) per step
# ---------------------------------------------------------------------------
def _mha_kernel(q_ref, k_ref, v_ref, o_ref, *, scale):
    q = q_ref[0]                                           # (H, nq, d) native dtype
    k = k_ref[0]                                           # (H, nk, d)
    v = v_ref[0]                                           # (H, nk, d)
    # Scores in f32 (MXU accumulates in f32 regardless of input dtype).
    s = jnp.einsum('hid,hjd->hij', q, k,
                   preferred_element_type=jnp.float32) * scale
    m = jnp.max(s, axis=-1, keepdims=True)
    p = jnp.exp(s - m)
    p = p / jnp.sum(p, axis=-1, keepdims=True)
    out = jnp.einsum('hij,hjd->hid', p.astype(v.dtype), v,
                     preferred_element_type=jnp.float32)   # (H, nq, d) f32
    o_ref[...] = out[None].astype(o_ref.dtype)


def multi_head_attention(q, k, v, *, scale):
    """q: (B, H, nq, d); k, v: (B, H, nk, d) -> (B, H, nq, d)."""
    B, H, nq, d = q.shape
    nk = k.shape[2]
    return pl.pallas_call(
        functools.partial(_mha_kernel, scale=scale),
        out_shape=jax.ShapeDtypeStruct((B, H, nq, d), q.dtype),
        grid=(B,),
        in_specs=[
            pl.BlockSpec((1, H, nq, d), lambda b: (b, 0, 0, 0)),
            pl.BlockSpec((1, H, nk, d), lambda b: (b, 0, 0, 0)),
            pl.BlockSpec((1, H, nk, d), lambda b: (b, 0, 0, 0)),
        ],
        out_specs=pl.BlockSpec((1, H, nq, d), lambda b: (b, 0, 0, 0)),
        compiler_params=pltpu.CompilerParams(
            dimension_semantics=("parallel",)),
    )(q, k, v)


# ---------------------------------------------------------------------------
# Full forward pass
# ---------------------------------------------------------------------------
@functools.partial(jax.jit, static_argnames=("num_heads",))
def cross_attention(x, c, wq, wk, wv, wo, bo, *, num_heads):
    B, nq, hidden = x.shape
    nk = c.shape[1]
    d = hidden // num_heads
    scale = d ** (-0.5)

    # Projections (Pallas matmul kernels) over the flattened token axis.
    q = linear(x.reshape(B * nq, hidden), wq)        # (B*nq, hidden)
    k = linear(c.reshape(B * nk, hidden), wk)        # (B*nk, hidden)
    v = linear(c.reshape(B * nk, hidden), wv)        # (B*nk, hidden)

    # Head split: layout-only, done in XLA so kernel blocks keep full trailing dims.
    def split(t, n):
        return t.reshape(B, n, num_heads, d).transpose(0, 2, 1, 3)

    qh, kh, vh = split(q, nq), split(k, nk), split(v, nk)   # (B, H, n, d)

    out = multi_head_attention(qh, kh, vh, scale=scale)     # (B, H, nq, d)
    out = out.transpose(0, 2, 1, 3).reshape(B * nq, hidden)  # merge heads

    out = linear(out, wo, bo)                                # to_out Linear (+bias)
    # Dropout(p=0.0) -> identity.
    return out.reshape(B, nq, hidden)


# ---------------------------------------------------------------------------
# Pure-JAX reference (HIGHEST precision so both paths compute in f32)
# ---------------------------------------------------------------------------
def cross_attention_ref(x, c, wq, wk, wv, wo, bo, *, num_heads):
    hp = jax.lax.Precision.HIGHEST
    B, nq, hidden = x.shape
    d = hidden // num_heads
    scale = d ** (-0.5)
    q = jnp.dot(x, wq.T, precision=hp)
    k = jnp.dot(c, wk.T, precision=hp)
    v = jnp.dot(c, wv.T, precision=hp)

    def split(t):
        b, n, _ = t.shape
        return t.reshape(b, n, num_heads, d).transpose(0, 2, 1, 3)

    q, k, v = split(q), split(k), split(v)
    sim = jnp.einsum('bhid,bhjd->bhij', q, k, precision=hp) * scale
    p = jax.nn.softmax(sim, axis=-1)
    o = jnp.einsum('bhij,bhjd->bhid', p, v, precision=hp)
    o = o.transpose(0, 2, 1, 3).reshape(B, nq, hidden)
    return jnp.dot(o, wo.T, precision=hp) + bo


if __name__ == "__main__":
    B, nq, nk, hidden, heads = 2, 8, 16, 32, 4            # dim_head = 8
    key = jax.random.PRNGKey(0)
    kx, kc, k1, k2, k3, k4, k5 = jax.random.split(key, 7)

    x = jax.random.normal(kx, (B, nq, hidden), dtype=jnp.float32)
    c = jax.random.normal(kc, (B, nk, hidden), dtype=jnp.float32)

    bound = 1.0 / (hidden ** 0.5)
    wq = jax.random.uniform(k1, (hidden, hidden), jnp.float32, -bound, bound)
    wk = jax.random.uniform(k2, (hidden, hidden), jnp.float32, -bound, bound)
    wv = jax.random.uniform(k3, (hidden, hidden), jnp.float32, -bound, bound)
    wo = jax.random.uniform(k4, (hidden, hidden), jnp.float32, -bound, bound)
    bo = jax.random.uniform(k5, (hidden,), jnp.float32, -bound, bound)

    out = jax.block_until_ready(
        cross_attention(x, c, wq, wk, wv, wo, bo, num_heads=heads))
    ref = cross_attention_ref(x, c, wq, wk, wv, wo, bo, num_heads=heads)

    assert out.shape == (B, nq, hidden)
    err = float(jnp.max(jnp.abs(out - ref)))
    assert jnp.allclose(out, ref, atol=2e-5, rtol=2e-5), f"max abs err = {err}"
    print("KERNEL_OK")
</pallas_src>

<mosaic_0001>
module attributes {stable_mosaic.version = 11 : i64} {
  func.func @_matmul_kernel(%arg0: i32, %arg1: memref<32x32xf32, #tpu.memory_space<vmem>>, %arg2: memref<32x32xf32, #tpu.memory_space<vmem>>, %arg3: memref<32x32xf32, #tpu.memory_space<vmem>>) attributes {dimension_semantics = [#tpu.dimension_semantics<parallel>], iteration_bounds = array<i64: 1>, scalar_prefetch = 0 : i64, scratch_operands = 0 : i64, tpu.core_type = #tpu.core_type<tc>, window_params = [{transform_indices = @transform_0, window_bounds = array<i64: 32, 32>}, {pipeline_mode = #tpu.pipeline_mode<synchronous>, transform_indices = @transform_1, window_bounds = array<i64: 32, 32>}, {transform_indices = @transform_2, window_bounds = array<i64: 32, 32>}]} {
    %c0 = arith.constant 0 : index
    %c0_0 = arith.constant 0 : index
    %0 = vector.load %arg1[%c0, %c0_0] : memref<32x32xf32, #tpu.memory_space<vmem>>, vector<32x32xf32>
    %c0_1 = arith.constant 0 : index
    %c0_2 = arith.constant 0 : index
    %1 = vector.load %arg2[%c0_1, %c0_2] : memref<32x32xf32, #tpu.memory_space<vmem>>, vector<32x32xf32>
    %cst = arith.constant dense<0.000000e+00> : vector<32x32xf32>
    %2 = tpu.matmul %0, %1, %cst {dimension_numbers = #tpu.dot_dimension_numbers<[1], [0], [0], [1], [0, 0, 1, 1], [], []>} : vector<32x32xf32>, vector<32x32xf32>, vector<32x32xf32> -> vector<32x32xf32>
    %c0_3 = arith.constant 0 : index
    %c0_4 = arith.constant 0 : index
    %3 = vector.load %arg3[%c0_3, %c0_4] : memref<32x32xf32, #tpu.memory_space<vmem>>, vector<32x32xf32>
    tpu.vector_store %arg3[%c0_3, %c0_4], %2 {strides = array<i32>} : memref<32x32xf32, #tpu.memory_space<vmem>>, vector<32x32xf32>,
    return
  }
  func.func @transform_0(%arg0: i32) -> (i32, i32) {
    %c0_i32 = arith.constant 0 : i32
    %c0_i32_0 = arith.constant 0 : i32
    return %arg0, %c0_i32 : i32, i32
  }
  func.func @transform_1(%arg0: i32) -> (i32, i32) {
    %c0_i32 = arith.constant 0 : i32
    %c0_i32_0 = arith.constant 0 : i32
    %c0_i32_1 = arith.constant 0 : i32
    return %c0_i32, %c0_i32_0 : i32, i32
  }
  func.func @transform_2(%arg0: i32) -> (i32, i32) {
    %c0_i32 = arith.constant 0 : i32
    %c0_i32_0 = arith.constant 0 : i32
    return %arg0, %c0_i32 : i32, i32
  }
}

module attributes {stable_mosaic.version = 11 : i64} {
  func.func @_matmul_kernel(%arg0: i32, %arg1: memref<16x32xf32, #tpu.memory_space<vmem>>, %arg2: memref<32x32xf32, #tpu.memory_space<vmem>>, %arg3: memref<16x32xf32, #tpu.memory_space<vmem>>) attributes {dimension_semantics = [#tpu.dimension_semantics<parallel>], iteration_bounds = array<i64: 1>, scalar_prefetch = 0 : i64, scratch_operands = 0 : i64, tpu.core_type = #tpu.core_type<tc>, window_params = [{transform_indices = @transform_0, window_bounds = array<i64: 16, 32>}, {pipeline_mode = #tpu.pipeline_mode<synchronous>, transform_indices = @transform_1, window_bounds = array<i64: 32, 32>}, {transform_indices = @transform_2, window_bounds = array<i64: 16, 32>}]} {
    %c0 = arith.constant 0 : index
    %c0_0 = arith.constant 0 : index
    %0 = vector.load %arg1[%c0, %c0_0] : memref<16x32xf32, #tpu.memory_space<vmem>>, vector<16x32xf32>
    %c0_1 = arith.constant 0 : index
    %c0_2 = arith.constant 0 : index
    %1 = vector.load %arg2[%c0_1, %c0_2] : memref<32x32xf32, #tpu.memory_space<vmem>>, vector<32x32xf32>
    %cst = arith.constant dense<0.000000e+00> : vector<16x32xf32>
    %2 = tpu.matmul %0, %1, %cst {dimension_numbers = #tpu.dot_dimension_numbers<[1], [0], [0], [1], [0, 0, 1, 1], [], []>} : vector<16x32xf32>, vector<32x32xf32>, vector<16x32xf32> -> vector<16x32xf32>
    %c0_3 = arith.constant 0 : index
    %c0_4 = arith.constant 0 : index
    %3 = vector.load %arg3[%c0_3, %c0_4] : memref<16x32xf32, #tpu.memory_space<vmem>>, vector<16x32xf32>
    tpu.vector_store %arg3[%c0_3, %c0_4], %2 {strides = array<i32>} : memref<16x32xf32, #tpu.memory_space<vmem>>, vector<16x32xf32>,
    return
  }
  func.func @transform_0(%arg0: i32) -> (i32, i32) {
    %c0_i32 = arith.constant 0 : i32
    %c0_i32_0 = arith.constant 0 : i32
    return %arg0, %c0_i32 : i32, i32
  }
  func.func @transform_1(%arg0: i32) -> (i32, i32) {
    %c0_i32 = arith.constant 0 : i32
    %c0_i32_0 = arith.constant 0 : i32
    %c0_i32_1 = arith.constant 0 : i32
    return %c0_i32, %c0_i32_0 : i32, i32
  }
  func.func @transform_2(%arg0: i32) -> (i32, i32) {
    %c0_i32 = arith.constant 0 : i32
    %c0_i32_0 = arith.constant 0 : i32
    return %arg0, %c0_i32 : i32, i32
  }
}

module attributes {stable_mosaic.version = 11 : i64} {
  func.func @_mha_kernel(%arg0: i32, %arg1: memref<1x4x8x8xf32, #tpu.memory_space<vmem>>, %arg2: memref<1x4x16x8xf32, #tpu.memory_space<vmem>>, %arg3: memref<1x4x16x8xf32, #tpu.memory_space<vmem>>, %arg4: memref<1x4x8x8xf32, #tpu.memory_space<vmem>>) attributes {dimension_semantics = [#tpu.dimension_semantics<parallel>], iteration_bounds = array<i64: 2>, scalar_prefetch = 0 : i64, scratch_operands = 0 : i64, tpu.core_type = #tpu.core_type<tc>, window_params = [{transform_indices = @transform_0, window_bounds = array<i64: 1, 4, 8, 8>}, {transform_indices = @transform_1, window_bounds = array<i64: 1, 4, 16, 8>}, {transform_indices = @transform_2, window_bounds = array<i64: 1, 4, 16, 8>}, {transform_indices = @transform_3, window_bounds = array<i64: 1, 4, 8, 8>}]} {
    %c0 = arith.constant 0 : index
    %c0_0 = arith.constant 0 : index
    %c0_1 = arith.constant 0 : index
    %c0_2 = arith.constant 0 : index
    %0 = vector.load %arg1[%c0, %c0_0, %c0_1, %c0_2] : memref<1x4x8x8xf32, #tpu.memory_space<vmem>>, vector<1x4x8x8xf32>
    %1 = vector.shape_cast %0 : vector<1x4x8x8xf32> to vector<4x8x8xf32>
    %c0_3 = arith.constant 0 : index
    %c0_4 = arith.constant 0 : index
    %c0_5 = arith.constant 0 : index
    %c0_6 = arith.constant 0 : index
    %2 = vector.load %arg2[%c0_3, %c0_4, %c0_5, %c0_6] : memref<1x4x16x8xf32, #tpu.memory_space<vmem>>, vector<1x4x16x8xf32>
    %3 = vector.shape_cast %2 : vector<1x4x16x8xf32> to vector<4x16x8xf32>
    %c0_7 = arith.constant 0 : index
    %c0_8 = arith.constant 0 : index
    %c0_9 = arith.constant 0 : index
    %c0_10 = arith.constant 0 : index
    %4 = vector.load %arg3[%c0_7, %c0_8, %c0_9, %c0_10] : memref<1x4x16x8xf32, #tpu.memory_space<vmem>>, vector<1x4x16x8xf32>
    %5 = vector.shape_cast %4 : vector<1x4x16x8xf32> to vector<4x16x8xf32>
    "tpu.trace_start"() <{level = 10 : i32, message = "hid,hjd->hij"}> : () -> ()
    %cst = arith.constant dense<0.000000e+00> : vector<4x8x16xf32>
    %6 = tpu.matmul %1, %3, %cst {dimension_numbers = #tpu.dot_dimension_numbers<[2], [2], [1], [1], [0, 0, 0, 1, 1, 1], [0], [0]>} : vector<4x8x8xf32>, vector<4x16x8xf32>, vector<4x8x16xf32> -> vector<4x8x16xf32>
    "tpu.trace_stop"() : () -> ()
    %cst_11 = arith.constant 0.353553385 : f32
    %7 = vector.broadcast %cst_11 : f32 to vector<4x8x16xf32>
    %8 = arith.mulf %6, %7 : vector<4x8x16xf32>
    %cst_12 = arith.constant dense<0xFF800000> : vector<4x8xf32>
    %9 = vector.multi_reduction <maximumf>, %8, %cst_12 [2] : vector<4x8x16xf32> to vector<4x8xf32>
    %10 = vector.shape_cast %9 : vector<4x8xf32> to vector<4x8x1xf32>
    %11 = vector.broadcast %10 : vector<4x8x1xf32> to vector<4x8x16xf32>
    %12 = arith.subf %8, %11 : vector<4x8x16xf32>
    %13 = math.exp %12 : vector<4x8x16xf32>
    %cst_13 = arith.constant dense<0.000000e+00> : vector<4x8xf32>
    %14 = vector.multi_reduction <add>, %13, %cst_13 [2] : vector<4x8x16xf32> to vector<4x8xf32>
    %15 = vector.shape_cast %14 : vector<4x8xf32> to vector<4x8x1xf32>
    %16 = vector.broadcast %15 : vector<4x8x1xf32> to vector<4x8x16xf32>
    %17 = arith.divf %13, %16 : vector<4x8x16xf32>
    "tpu.trace_start"() <{level = 10 : i32, message = "hij,hjd->hid"}> : () -> ()
    %cst_14 = arith.constant dense<0.000000e+00> : vector<4x8x8xf32>
    %18 = tpu.matmul %17, %5, %cst_14 {dimension_numbers = #tpu.dot_dimension_numbers<[2], [1], [1], [2], [0, 0, 0, 1, 1, 2], [0], [0]>} : vector<4x8x16xf32>, vector<4x16x8xf32>, vector<4x8x8xf32> -> vector<4x8x8xf32>
    "tpu.trace_stop"() : () -> ()
    %19 = vector.shape_cast %18 : vector<4x8x8xf32> to vector<1x4x8x8xf32>
    %c0_15 = arith.constant 0 : index
    %c0_16 = arith.constant 0 : index
    %c0_17 = arith.constant 0 : index
    %c0_18 = arith.constant 0 : index
    %20 = vector.load %arg4[%c0_15, %c0_16, %c0_17, %c0_18] : memref<1x4x8x8xf32, #tpu.memory_space<vmem>>, vector<1x4x8x8xf32>
    tpu.vector_store %arg4[%c0_15, %c0_16, %c0_17, %c0_18], %19 {strides = array<i32>} : memref<1x4x8x8xf32, #tpu.memory_space<vmem>>, vector<1x4x8x8xf32>,
    return
  }
  func.func @transform_0(%arg0: i32) -> (i32, i32, i32, i32) {
    %c0_i32 = arith.constant 0 : i32
    %c0_i32_0 = arith.constant 0 : i32
    %c0_i32_1 = arith.constant 0 : i32
    %c0_i32_2 = arith.constant 0 : i32
    return %arg0, %c0_i32, %c0_i32_0, %c0_i32_1 : i32, i32, i32, i32
  }
  func.func @transform_1(%arg0: i32) -> (i32, i32, i32, i32) {
    %c0_i32 = arith.constant 0 : i32
    %c0_i32_0 = arith.constant 0 : i32
    %c0_i32_1 = arith.constant 0 : i32
    %c0_i32_2 = arith.constant 0 : i32
    return %arg0, %c0_i32, %c0_i32_0, %c0_i32_1 : i32, i32, i32, i32
  }
  func.func @transform_2(%arg0: i32) -> (i32, i32, i32, i32) {
    %c0_i32 = arith.constant 0 : i32
    %c0_i32_0 = arith.constant 0 : i32
    %c0_i32_1 = arith.constant 0 : i32
    %c0_i32_2 = arith.constant 0 : i32
    return %arg0, %c0_i32, %c0_i32_0, %c0_i32_1 : i32, i32, i32, i32
  }
  func.func @transform_3(%arg0: i32) -> (i32, i32, i32, i32) {
    %c0_i32 = arith.constant 0 : i32
    %c0_i32_0 = arith.constant 0 : i32
    %c0_i32_1 = arith.constant 0 : i32
    %c0_i32_2 = arith.constant 0 : i32
    return %arg0, %c0_i32, %c0_i32_0, %c0_i32_1 : i32, i32, i32, i32
  }
}

module attributes {stable_mosaic.version = 11 : i64} {
  func.func @_matmul_bias_kernel(%arg0: i32, %arg1: memref<16x32xf32, #tpu.memory_space<vmem>>, %arg2: memref<32x32xf32, #tpu.memory_space<vmem>>, %arg3: memref<1x32xf32, #tpu.memory_space<vmem>>, %arg4: memref<16x32xf32, #tpu.memory_space<vmem>>) attributes {dimension_semantics = [#tpu.dimension_semantics<parallel>], iteration_bounds = array<i64: 1>, scalar_prefetch = 0 : i64, scratch_operands = 0 : i64, tpu.core_type = #tpu.core_type<tc>, window_params = [{transform_indices = @transform_0, window_bounds = array<i64: 16, 32>}, {pipeline_mode = #tpu.pipeline_mode<synchronous>, transform_indices = @transform_1, window_bounds = array<i64: 32, 32>}, {pipeline_mode = #tpu.pipeline_mode<synchronous>, transform_indices = @transform_2, window_bounds = array<i64: 1, 32>}, {transform_indices = @transform_3, window_bounds = array<i64: 16, 32>}]} {
    %c0 = arith.constant 0 : index
    %c0_0 = arith.constant 0 : index
    %0 = vector.load %arg1[%c0, %c0_0] : memref<16x32xf32, #tpu.memory_space<vmem>>, vector<16x32xf32>
    %c0_1 = arith.constant 0 : index
    %c0_2 = arith.constant 0 : index
    %1 = vector.load %arg2[%c0_1, %c0_2] : memref<32x32xf32, #tpu.memory_space<vmem>>, vector<32x32xf32>
    %cst = arith.constant dense<0.000000e+00> : vector<16x32xf32>
    %2 = tpu.matmul %0, %1, %cst {dimension_numbers = #tpu.dot_dimension_numbers<[1], [0], [0], [1], [0, 0, 1, 1], [], []>} : vector<16x32xf32>, vector<32x32xf32>, vector<16x32xf32> -> vector<16x32xf32>
    %c0_3 = arith.constant 0 : index
    %c0_4 = arith.constant 0 : index
    %3 = vector.load %arg3[%c0_3, %c0_4] : memref<1x32xf32, #tpu.memory_space<vmem>>, vector<1x32xf32>
    %4 = vector.broadcast %3 : vector<1x32xf32> to vector<16x32xf32>
    %5 = arith.addf %2, %4 : vector<16x32xf32>
    %c0_5 = arith.constant 0 : index
    %c0_6 = arith.constant 0 : index
    %6 = vector.load %arg4[%c0_5, %c0_6] : memref<16x32xf32, #tpu.memory_space<vmem>>, vector<16x32xf32>
    tpu.vector_store %arg4[%c0_5, %c0_6], %5 {strides = array<i32>} : memref<16x32xf32, #tpu.memory_space<vmem>>, vector<16x32xf32>,
    return
  }
  func.func @transform_0(%arg0: i32) -> (i32, i32) {
    %c0_i32 = arith.constant 0 : i32
    %c0_i32_0 = arith.constant 0 : i32
    return %arg0, %c0_i32 : i32, i32
  }
  func.func @transform_1(%arg0: i32) -> (i32, i32) {
    %c0_i32 = arith.constant 0 : i32
    %c0_i32_0 = arith.constant 0 : i32
    %c0_i32_1 = arith.constant 0 : i32
    return %c0_i32, %c0_i32_0 : i32, i32
  }
  func.func @transform_2(%arg0: i32) -> (i32, i32) {
    %c0_i32 = arith.constant 0 : i32
    %c0_i32_0 = arith.constant 0 : i32
    %c0_i32_1 = arith.constant 0 : i32
    return %c0_i32, %c0_i32_0 : i32, i32
  }
  func.func @transform_3(%arg0: i32) -> (i32, i32) {
    %c0_i32 = arith.constant 0 : i32
    %c0_i32_0 = arith.constant 0 : i32
    return %arg0, %c0_i32 : i32, i32
  }
}

</mosaic_0001>

<llo_original>
// kernel: cross_attention.5
$region0: #{cross_attention.5}
  #allocation0 [shape = 'u32[]', space=smem, size = 0x4, offset = 0x4, fixed_abs, tag = 'smem constant byte address 0x4 - core index']
  #allocation1 [shape = 'u32[144,128]{1,0:T(1,128)}', space=vmem, size = 0x12000, scoped, tag = 'internal scratch']
  %s0 = inlined_call_operand.vmem [shape: f32[16,32], index: 0, kind: input, shape index: {}]
  %s1 = inlined_call_operand.vmem [shape: f32[32,32], index: 1, kind: input, shape index: {}]
  %s2 = inlined_call_operand.vmem [shape: f32[16,32], index: 2, kind: output, shape index: {}]
  %s3 = sld [smem:[#allocation0]]
  $region18: #{cross_attention.5} parent=0
    _
  %s5 = ssub.s32 1, %s3
  %s6 = scalar_select 0, %s5, %s3
  // Predicated region
  $region2: #{cross_attention.5} parent=0 // pred_check
    _
  $region3: #{cross_attention.5} parent=0 // pred_check_branch
    %8 = sbr.rel (0) target = $region5
  $region4: #{cross_attention.5} parent=0 // pred_region
    _
  $region5: #{cross_attention.5} parent=0 // pred_fallthru
    _
  // Predicated region
  $region6: #{cross_attention.5} parent=0 // pred_check
    _
  $region7: #{cross_attention.5} parent=0 // pred_check_branch
    %10 = sbr.rel (0) target = $region9
  $region8: #{cross_attention.5} parent=0 // pred_region
    _
  $region9: #{cross_attention.5} parent=0 // pred_fallthru
    _
  %v11 = vld [vmem:[%s0] sm:$0xff]
  %v12 = vld [vmem:[%s0 + $0x8] sm:$0xff]
  %v13 = vld [vmem:[%s1] sm:$0xff]
  %v14 = vld [vmem:[%s1 + $0x8] sm:$0xff]
  %v15 = vld [vmem:[%s1 + $0x10] sm:$0xff]
  %v16 = vld [vmem:[%s1 + $0x18] sm:$0xff]
  %vm17 = vcmask 261120
  %v19 = vsel %vm17, %v11, 0
  %v22 = vsel %vm17, %v12, 0
  %24 = vmatprep.subr.mxu0 0.0
  %25 = vmatpush1.msra.mxu0 %v13
  %26 = vmatprep.subr.mxu0 0.0
  %27 = vmatpush1.msra.mxu0 %v14
  %28 = vmatprep.subr.mxu0 0.0
  %29 = vmatpush1.msra.mxu0 %v15
  %30 = vmatprep.subr.mxu0 0.0
  %31 = vmatpush1.msra.mxu0 %v16
  %32 = vmatprep.subr.mxu0 0.0
  %33 = vmatpush1.msra.mxu0 0.0
  %34 = vmatprep.subr.mxu0 0.0
  %35 = vmatpush1.msra.mxu0 0.0
  %36 = vmatprep.subr.mxu0 0.0
  %37 = vmatpush1.msra.mxu0 0.0
  %38 = vmatprep.subr.mxu0 0.0
  %39 = vmatpush1.msra.mxu0 0.0
  %40 = vmatprep.subr.mxu0 0.0
  %41 = vmatpush1.msra.mxu0 0.0
  %42 = vmatprep.subr.mxu0 0.0
  %43 = vmatpush1.msra.mxu0 0.0
  %44 = vmatprep.subr.mxu0 0.0
  %45 = vmatpush1.msra.mxu0 0.0
  %46 = vmatprep.subr.mxu0 0.0
  %47 = vmatpush1.msra.mxu0 0.0
  %48 = vmatprep.subr.mxu0 0.0
  %49 = vmatpush1.msra.mxu0 0.0
  %50 = vmatprep.subr.mxu0 0.0
  %51 = vmatpush1.msra.mxu0 0.0
  %52 = vmatprep.subr.mxu0 0.0
  %53 = vmatpush1.msra.mxu0 0.0
  %54 = vmatprep.subr.mxu0 0.0
  %55 = vmatpush1.msra.mxu0 0.0
  %56 = vmatprep.subr.mxu0 0.0
  %57 = vmatpush1.msra.mxu0 0.0
  %58 = vmatprep.subr.mxu0 0.0
  %59 = vmatpush1.msra.mxu0 0.0
  %60 = vmatprep.subr.mxu0 0.0
  %61 = vmatpush1.msra.mxu0 0.0
  %62 = vmatprep.subr.mxu0 0.0
  %63 = vmatpush1.msra.mxu0 0.0
  %64 = vmatprep.subr.mxu0 0.0
  %65 = vmatpush1.msra.mxu0 0.0
  %66 = vmatprep.subr.mxu0 0.0
  %67 = vmatpush1.msra.mxu0 0.0
  %68 = vmatprep.subr.mxu0 0.0
  %69 = vmatpush1.msra.mxu0 0.0
  %70 = vmatprep.subr.mxu0 0.0
  %71 = vmatpush1.msra.mxu0 0.0
  %72 = vmatprep.subr.mxu0 0.0
  %73 = vmatpush1.msra.mxu0 0.0
  %74 = vmatprep.subr.mxu0 0.0
  %75 = vmatpush1.msra.mxu0 0.0
  %76 = vmatprep.subr.mxu0 0.0
  %77 = vmatpush1.msra.mxu0 0.0
  %78 = vmatprep.subr.mxu0 0.0
  %79 = vmatpush1.msra.mxu0 0.0
  %80 = vmatprep.subr.mxu0 0.0
  %81 = vmatpush1.msra.mxu0 0.0
  %82 = vmatprep.subr.mxu0 0.0
  %83 = vmatpush1.msra.mxu0 0.0
  %84 = vmatprep.subr.mxu0 0.0
  %85 = vmatpush1.msra.mxu0 0.0
  %86 = vmatprep.subr.mxu0 0.0
  %87 = vmatpush1.msra.mxu0 0.0
  %88 = vmatprep.mubr.f32.mxu0 0.0
  %89 = vmatmul.mubr.f32.gmra.mrb[0].mxu0 %v19
  %v90 = vpop.f32.mrb[0].mxu0
  %v91 = vadd.f32 0.0, %v90
  %v92 = vpop.f32.mrb[0].mxu0
  %93 = vmatprep.mubr.f32.mxu0 0.0
  %94 = vmatmul.mubr.f32.gmra.mrb[0].mxu0 %v22
  %v95 = vpop.f32.mrb[0].mxu0
  %v96 = vadd.f32 0.0, %v95
  %v97 = vpop.f32.mrb[0].mxu0
  %98 = vdwg.mxu0
  %99 = vst.msk [vmem:[%s2] sm:$0xff] %vm17, %v91
  %100 = vst.msk [vmem:[%s2 + $0x8] sm:$0xff] %vm17, %v96
  // Predicated region
  $region10: #{cross_attention.5} parent=0 // pred_check
    _
  $region11: #{cross_attention.5} parent=0 // pred_check_branch
    %102 = sbr.rel (0) target = $region13
  $region12: #{cross_attention.5} parent=0 // pred_region
    _
  $region13: #{cross_attention.5} parent=0 // pred_fallthru
    _
  // Predicated region
  $region14: #{cross_attention.5} parent=0 // pred_check
    _
  $region15: #{cross_attention.5} parent=0 // pred_check_branch
    %104 = sbr.rel (0) target = $region17
  $region16: #{cross_attention.5} parent=0 // pred_region
    _
  $region17: #{cross_attention.5} parent=0 // pred_fallthru
    _

// kernel: cross_attention.6
$region0: #{cross_attention.6}
  #allocation0 [shape = 'u32[]', space=smem, size = 0x4, offset = 0x4, fixed_abs, tag = 'smem constant byte address 0x4 - core index']
  #allocation1 [shape = 'u32[144,128]{1,0:T(1,128)}', space=vmem, size = 0x12000, scoped, tag = 'internal scratch']
  %s0 = inlined_call_operand.vmem [shape: f32[32,32], index: 0, kind: input, shape index: {}]
  %s1 = inlined_call_operand.vmem [shape: f32[32,32], index: 1, kind: input, shape index: {}]
  %s2 = inlined_call_operand.vmem [shape: f32[32,32], index: 2, kind: output, shape index: {}]
  %s3 = sld [smem:[#allocation0]]
  $region18: #{cross_attention.6} parent=0
    _
  %s5 = ssub.s32 1, %s3
  %s6 = scalar_select 0, %s5, %s3
  // Predicated region
  $region2: #{cross_attention.6} parent=0 // pred_check
    _
  $region3: #{cross_attention.6} parent=0 // pred_check_branch
    %8 = sbr.rel (0) target = $region5
  $region4: #{cross_attention.6} parent=0 // pred_region
    _
  $region5: #{cross_attention.6} parent=0 // pred_fallthru
    _
  // Predicated region
  $region6: #{cross_attention.6} parent=0 // pred_check
    _
  $region7: #{cross_attention.6} parent=0 // pred_check_branch
    %10 = sbr.rel (0) target = $region9
  $region8: #{cross_attention.6} parent=0 // pred_region
    _
  $region9: #{cross_attention.6} parent=0 // pred_fallthru
    _
  %v11 = vld [vmem:[%s0] sm:$0xff]
  %v12 = vld [vmem:[%s0 + $0x8] sm:$0xff]
  %v13 = vld [vmem:[%s0 + $0x10] sm:$0xff]
  %v14 = vld [vmem:[%s0 + $0x18] sm:$0xff]
  %v15 = vld [vmem:[%s1] sm:$0xff]
  %v16 = vld [vmem:[%s1 + $0x8] sm:$0xff]
  %v17 = vld [vmem:[%s1 + $0x10] sm:$0xff]
  %v18 = vld [vmem:[%s1 + $0x18] sm:$0xff]
  %vm19 = vcmask 261120
  %v21 = vsel %vm19, %v11, 0
  %v24 = vsel %vm19, %v12, 0
  %v27 = vsel %vm19, %v13, 0
  %v30 = vsel %vm19, %v14, 0
  %32 = vmatprep.subr.mxu0 0.0
  %33 = vmatpush1.msra.mxu0 %v15
  %34 = vmatprep.subr.mxu0 0.0
  %35 = vmatpush1.msra.mxu0 %v16
  %36 = vmatprep.subr.mxu0 0.0
  %37 = vmatpush1.msra.mxu0 %v17
  %38 = vmatprep.subr.mxu0 0.0
  %39 = vmatpush1.msra.mxu0 %v18
  %40 = vmatprep.subr.mxu0 0.0
  %41 = vmatpush1.msra.mxu0 0.0
  %42 = vmatprep.subr.mxu0 0.0
  %43 = vmatpush1.msra.mxu0 0.0
  %44 = vmatprep.subr.mxu0 0.0
  %45 = vmatpush1.msra.mxu0 0.0
  %46 = vmatprep.subr.mxu0 0.0
  %47 = vmatpush1.msra.mxu0 0.0
  %48 = vmatprep.subr.mxu0 0.0
  %49 = vmatpush1.msra.mxu0 0.0
  %50 = vmatprep.subr.mxu0 0.0
  %51 = vmatpush1.msra.mxu0 0.0
  %52 = vmatprep.subr.mxu0 0.0
  %53 = vmatpush1.msra.mxu0 0.0
  %54 = vmatprep.subr.mxu0 0.0
  %55 = vmatpush1.msra.mxu0 0.0
  %56 = vmatprep.subr.mxu0 0.0
  %57 = vmatpush1.msra.mxu0 0.0
  %58 = vmatprep.subr.mxu0 0.0
  %59 = vmatpush1.msra.mxu0 0.0
  %60 = vmatprep.subr.mxu0 0.0
  %61 = vmatpush1.msra.mxu0 0.0
  %62 = vmatprep.subr.mxu0 0.0
  %63 = vmatpush1.msra.mxu0 0.0
  %64 = vmatprep.subr.mxu0 0.0
  %65 = vmatpush1.msra.mxu0 0.0
  %66 = vmatprep.subr.mxu0 0.0
  %67 = vmatpush1.msra.mxu0 0.0
  %68 = vmatprep.subr.mxu0 0.0
  %69 = vmatpush1.msra.mxu0 0.0
  %70 = vmatprep.subr.mxu0 0.0
  %71 = vmatpush1.msra.mxu0 0.0
  %72 = vmatprep.subr.mxu0 0.0
  %73 = vmatpush1.msra.mxu0 0.0
  %74 = vmatprep.subr.mxu0 0.0
  %75 = vmatpush1.msra.mxu0 0.0
  %76 = vmatprep.subr.mxu0 0.0
  %77 = vmatpush1.msra.mxu0 0.0
  %78 = vmatprep.subr.mxu0 0.0
  %79 = vmatpush1.msra.mxu0 0.0
  %80 = vmatprep.subr.mxu0 0.0
  %81 = vmatpush1.msra.mxu0 0.0
  %82 = vmatprep.subr.mxu0 0.0
  %83 = vmatpush1.msra.mxu0 0.0
  %84 = vmatprep.subr.mxu0 0.0
  %85 = vmatpush1.msra.mxu0 0.0
  %86 = vmatprep.subr.mxu0 0.0
  %87 = vmatpush1.msra.mxu0 0.0
  %88 = vmatprep.subr.mxu0 0.0
  %89 = vmatpush1.msra.mxu0 0.0
  %90 = vmatprep.subr.mxu0 0.0
  %91 = vmatpush1.msra.mxu0 0.0
  %92 = vmatprep.subr.mxu0 0.0
  %93 = vmatpush1.msra.mxu0 0.0
  %94 = vmatprep.subr.mxu0 0.0
  %95 = vmatpush1.msra.mxu0 0.0
  %96 = vmatprep.mubr.f32.mxu0 0.0
  %97 = vmatmul.mubr.f32.gmra.mrb[0].mxu0 %v21
  %v98 = vpop.f32.mrb[0].mxu0
  %v99 = vadd.f32 0.0, %v98
  %v100 = vpop.f32.mrb[0].mxu0
  %101 = vmatprep.mubr.f32.mxu0 0.0
  %102 = vmatmul.mubr.f32.gmra.mrb[0].mxu0 %v24
  %v103 = vpop.f32.mrb[0].mxu0
  %v104 = vadd.f32 0.0, %v103
  %v105 = vpop.f32.mrb[0].mxu0
  %106 = vmatprep.mubr.f32.mxu0 0.0
  %107 = vmatmul.mubr.f32.gmra.mrb[0].mxu0 %v27
  %v108 = vpop.f32.mrb[0].mxu0
  %v109 = vadd.f32 0.0, %v108
  %v110 = vpop.f32.mrb[0].mxu0
  %111 = vmatprep.mubr.f32.mxu0 0.0
  %112 = vmatmul.mubr.f32.gmra.mrb[0].mxu0 %v30
  %v113 = vpop.f32.mrb[0].mxu0
  %v114 = vadd.f32 0.0, %v113
  %v115 = vpop.f32.mrb[0].mxu0
  %116 = vdwg.mxu0
  %117 = vst.msk [vmem:[%s2] sm:$0xff] %vm19, %v99
  %118 = vst.msk [vmem:[%s2 + $0x8] sm:$0xff] %vm19, %v104
  %119 = vst.msk [vmem:[%s2 + $0x10] sm:$0xff] %vm19, %v109
  %120 = vst.msk [vmem:[%s2 + $0x18] sm:$0xff] %vm19, %v114
  // Predicated region
  $region10: #{cross_attention.6} parent=0 // pred_check
    _
  $region11: #{cross_attention.6} parent=0 // pred_check_branch
    %122 = sbr.rel (0) target = $region13
  $region12: #{cross_attention.6} parent=0 // pred_region
    _
  $region13: #{cross_attention.6} parent=0 // pred_fallthru
    _
  // Predicated region
  $region14: #{cross_attention.6} parent=0 // pred_check
    _
  $region15: #{cross_attention.6} parent=0 // pred_check_branch
    %124 = sbr.rel (0) target = $region17
  $region16: #{cross_attention.6} parent=0 // pred_region
    _
  $region17: #{cross_attention.6} parent=0 // pred_fallthru
    _

// kernel: cross_attention.9
$region0: #{cross_attention.9}
  #allocation0 [shape = 'u32[]', space=smem, size = 0x4, offset = 0x4, fixed_abs, tag = 'smem constant byte address 0x4 - core index']
  #allocation1 [shape = 'u32[144,128]{1,0:T(1,128)}', space=vmem, size = 0x12000, scoped, tag = 'internal scratch']
  %s0 = inlined_call_operand.vmem [shape: f32[16,32], index: 0, kind: input, shape index: {}]
  %s1 = inlined_call_operand.vmem [shape: f32[32,32], index: 1, kind: input, shape index: {}]
  %s2 = inlined_call_operand.vmem [shape: f32[1,32], index: 2, kind: input, shape index: {}]
  %s3 = inlined_call_operand.hbm [shape: f32[16,32], index: 3, kind: output, shape index: {}]
  %s4 = sld [smem:[#allocation0]]
  $region22: #{cross_attention.9} parent=0
    _
  %s6 = ssub.s32 1, %s4
  %s7 = scalar_select 0, %s6, %s4
  $region1: #{cross_attention.9} parent=0
    #allocation2 [shape = 'u8[8192]{0}', space=vmem, size = 0x2000, scoped, tag = 'output window, operand 0, single buffered']
    #allocation3 [shape = 's32[1]{0}', space=sflag, size = 0x4, scoped, tag = 'scoped memory for cross_attention.9']
    %8 = vsyncpa [#allocation3], 0
    // Predicated region
    $region2: #{cross_attention.9} parent=1 // pred_check
      _
    $region3: #{cross_attention.9} parent=1 // pred_check_branch
      %10 = sbr.rel (0) target = $region5
    $region4: #{cross_attention.9} parent=1 // pred_region
      _
    $region5: #{cross_attention.9} parent=1 // pred_fallthru
      _
    // Predicated region
    $region6: #{cross_attention.9} parent=1 // pred_check
      _
    $region7: #{cross_attention.9} parent=1 // pred_check_branch
      %12 = sbr.rel (0) target = $region9
    $region8: #{cross_attention.9} parent=1 // pred_region
      _
    $region9: #{cross_attention.9} parent=1 // pred_fallthru
      _
    // Predicated region
    $region10: #{cross_attention.9} parent=1 // pred_check
      _
    $region11: #{cross_attention.9} parent=1 // pred_check_branch
      %14 = sbr.rel (0) target = $region13
    $region12: #{cross_attention.9} parent=1 // pred_region
      _
    $region13: #{cross_attention.9} parent=1 // pred_fallthru
      _
    %v15 = vld [vmem:[%s0] sm:$0xff]
    %v16 = vld [vmem:[%s0 + $0x8] sm:$0xff]
    %v17 = vld [vmem:[%s1] sm:$0xff]
    %v18 = vld [vmem:[%s1 + $0x8] sm:$0xff]
    %v19 = vld [vmem:[%s1 + $0x10] sm:$0xff]
    %v20 = vld [vmem:[%s1 + $0x18] sm:$0xff]
    %v21 = vld [vmem:[%s2] sm:$0x1]
    %v23 = vlaneseq
    %v24 = vshrl.u32 %v23, 7
    %v25 = vsub.s32 0, %v24
    %v26 = vrot.slane %v21, %v25
    %vm28 = vcmask 261120
    %v30 = vsel %vm28, %v15, 0
    %v33 = vsel %vm28, %v16, 0
    %35 = vmatprep.subr.mxu0 0.0
    %36 = vmatpush1.msra.mxu0 %v17
    %37 = vmatprep.subr.mxu0 0.0
    %38 = vmatpush1.msra.mxu0 %v18
    %39 = vmatprep.subr.mxu0 0.0
    %40 = vmatpush1.msra.mxu0 %v19
    %41 = vmatprep.subr.mxu0 0.0
    %42 = vmatpush1.msra.mxu0 %v20
    %43 = vmatprep.subr.mxu0 0.0
    %44 = vmatpush1.msra.mxu0 0.0
    %45 = vmatprep.subr.mxu0 0.0
    %46 = vmatpush1.msra.mxu0 0.0
    %47 = vmatprep.subr.mxu0 0.0
    %48 = vmatpush1.msra.mxu0 0.0
    %49 = vmatprep.subr.mxu0 0.0
    %50 = vmatpush1.msra.mxu0 0.0
    %51 = vmatprep.subr.mxu0 0.0
    %52 = vmatpush1.msra.mxu0 0.0
    %53 = vmatprep.subr.mxu0 0.0
    %54 = vmatpush1.msra.mxu0 0.0
    %55 = vmatprep.subr.mxu0 0.0
    %56 = vmatpush1.msra.mxu0 0.0
    %57 = vmatprep.subr.mxu0 0.0
    %58 = vmatpush1.msra.mxu0 0.0
    %59 = vmatprep.subr.mxu0 0.0
    %60 = vmatpush1.msra.mxu0 0.0
    %61 = vmatprep.subr.mxu0 0.0
    %62 = vmatpush1.msra.mxu0 0.0
    %63 = vmatprep.subr.mxu0 0.0
    %64 = vmatpush1.msra.mxu0 0.0
    %65 = vmatprep.subr.mxu0 0.0
    %66 = vmatpush1.msra.mxu0 0.0
    %67 = vmatprep.subr.mxu0 0.0
    %68 = vmatpush1.msra.mxu0 0.0
    %69 = vmatprep.subr.mxu0 0.0
    %70 = vmatpush1.msra.mxu0 0.0
    %71 = vmatprep.subr.mxu0 0.0
    %72 = vmatpush1.msra.mxu0 0.0
    %73 = vmatprep.subr.mxu0 0.0
    %74 = vmatpush1.msra.mxu0 0.0
    %75 = vmatprep.subr.mxu0 0.0
    %76 = vmatpush1.msra.mxu0 0.0
    %77 = vmatprep.subr.mxu0 0.0
    %78 = vmatpush1.msra.mxu0 0.0
    %79 = vmatprep.subr.mxu0 0.0
    %80 = vmatpush1.msra.mxu0 0.0
    %81 = vmatprep.subr.mxu0 0.0
    %82 = vmatpush1.msra.mxu0 0.0
    %83 = vmatprep.subr.mxu0 0.0
    %84 = vmatpush1.msra.mxu0 0.0
    %85 = vmatprep.subr.mxu0 0.0
    %86 = vmatpush1.msra.mxu0 0.0
    %87 = vmatprep.subr.mxu0 0.0
    %88 = vmatpush1.msra.mxu0 0.0
    %89 = vmatprep.subr.mxu0 0.0
    %90 = vmatpush1.msra.mxu0 0.0
    %91 = vmatprep.subr.mxu0 0.0
    %92 = vmatpush1.msra.mxu0 0.0
    %93 = vmatprep.subr.mxu0 0.0
    %94 = vmatpush1.msra.mxu0 0.0
    %95 = vmatprep.subr.mxu0 0.0
    %96 = vmatpush1.msra.mxu0 0.0
    %97 = vmatprep.subr.mxu0 0.0
    %98 = vmatpush1.msra.mxu0 0.0
    %99 = vmatprep.mubr.f32.mxu0 0.0
    %100 = vmatmul.mubr.f32.gmra.mrb[0].mxu0 %v30
    %v101 = vpop.f32.mrb[0].mxu0
    %v102 = vadd.f32 %v26, %v101
    %v103 = vpop.f32.mrb[0].mxu0
    %104 = vmatprep.mubr.f32.mxu0 0.0
    %105 = vmatmul.mubr.f32.gmra.mrb[0].mxu0 %v33
    %v106 = vpop.f32.mrb[0].mxu0
    %v107 = vadd.f32 %v26, %v106
    %v108 = vpop.f32.mrb[0].mxu0
    %109 = vdwg.mxu0
    %110 = vst.msk [vmem:[#allocation2] sm:$0xff] %vm28, %v102
    %111 = vst.msk [vmem:[#allocation2 + $0x8] sm:$0xff] %vm28, %v107
    // Predicated region
    $region14: #{cross_attention.9} parent=1 // pred_check
      _
    $region15: #{cross_attention.9} parent=1 // pred_check_branch
      %113 = sbr.rel (0) target = $region17
    $region16: #{cross_attention.9} parent=1 // pred_region
      %s115 = ssub.s32 256, 256
      %116 = vsyncadd [#allocation3], %s115
      %s117 = sshll.u32 [#allocation2], 4
      %s118 = int_to_ptr.vmem [resolvable:$true] %s117
      %123 = dma.vmem_to_hbm [thread:$0]  %s118, 256, %s3, [#allocation3], 128, 128, 8
    $region17: #{cross_attention.9} parent=1 // pred_fallthru
      _
    // Predicated region
    $region18: #{cross_attention.9} parent=1 // pred_check
      _
    $region19: #{cross_attention.9} parent=1 // pred_check_branch
      %125 = sbr.rel (0) target = $region21
    $region20: #{cross_attention.9} parent=1 // pred_region
      %126 = dma.done [#allocation3], 256
    $region21: #{cross_attention.9} parent=1 // pred_fallthru
      _
    %127 = vsyncpa [#allocation3], 1

// kernel: cross_attention.8
$region0: #{cross_attention.8}
  #allocation0 [shape = 'u32[]', space=smem, size = 0x4, offset = 0x4, fixed_abs, tag = 'smem constant byte address 0x4 - core index']
  #allocation1 [shape = 'u32[144,128]{1,0:T(1,128)}', space=vmem, size = 0x12000, scoped, tag = 'internal scratch']
  %s0 = inlined_call_operand.vmem [shape: f32[2,4,8,8], index: 0, kind: input, shape index: {}]
  %s1 = inlined_call_operand.vmem [shape: f32[2,4,16,8], index: 1, kind: input, shape index: {}]
  %s2 = inlined_call_operand.vmem [shape: f32[2,4,16,8], index: 2, kind: input, shape index: {}]
  %s3 = inlined_call_operand.vmem [shape: f32[2,4,8,8], index: 3, kind: output, shape index: {}]
  %s4 = sld [smem:[#allocation0]]
  $region45: #{cross_attention.8} parent=0
    _
  %s6 = ssub.s32 1, %s4
  %s7 = scalar_select 0, %s6, %s4
  loop: start=0, step=1, limit=4
  $region2: #{cross_attention.8} parent=0 // loop_pre_header
    _
  $region3: #{cross_attention.8} parent=0 // loop_header
    %s9 = sphi 0, %s13
    %p10 = scmp.ge.s32.totalorder %s9, 4
    %s19 = sphi 0, %s21
    %s22 = sphi 0, %s19
    %s23 = sphi 0, %s22
    %s39 = sphi 0, %s23
    %s45 = sphi 0, %s47
    %s48 = sphi 0, %s45
    %s49 = sphi 0, %s48
    %s65 = sphi 0, %s49
    %s71 = sphi 0, %s73
    %s74 = sphi 0, %s71
    %s75 = sphi 0, %s74
    %s91 = sphi 0, %s75
    %s97 = sphi 0, %s99
    %s100 = sphi 0, %s97
    %s101 = sphi 0, %s100
    %s117 = sphi 0, %s101
  $region4: #{cross_attention.8} parent=0 // loop_header_branch
    %12 = sbr.rel (%p10) target = $region8
  $region5: #{cross_attention.8} parent=0 // loop_body
    %s14 = ssub.s32 %s9, 1
    %s15 = ssub.s32 %s9, 2
    %s16 = sadd.s32 %s9, 1
    %s17 = ssub.s32 %s9, %s16
    %p18 = scmp.eq.s32.totalorder %s17, 0
    %s20 = sadd.s32 %s19, 1
    %s21 = scalar_select %p18, %s19, %s20
    %p24 = pneg %p18
    %p25 = scmp.eq.s32.totalorder %s9, 1
    %p26 = por %p24, %p25
    %p27 = scmp.ne.s32.totalorder %s19, %s22
    %p28 = scmp.eq.s32.totalorder %s9, 0
    %p29 = por %p27, %p28
    %p30 = scmp.ne.s32.totalorder %s19, %s22
    %p31 = scmp.eq.s32.totalorder %s14, 1
    %p32 = por %p30, %p31
    %p33 = scmp.ne.s32.totalorder %s22, %s23
    %p34 = scmp.eq.s32.totalorder %s14, 0
    %p35 = por %p33, %p34
    %p36 = scmp.ne.s32.totalorder %s22, %s23
    %p37 = scmp.eq.s32.totalorder %s15, 1
    %p38 = por %p36, %p37
    %p40 = scmp.ne.s32.totalorder %s23, %s39
    %p41 = scmp.eq.s32.totalorder %s15, 0
    %p42 = por %p40, %p41
    %s43 = ssub.s32 %s9, %s16
    %p44 = scmp.eq.s32.totalorder %s43, 0
    %s46 = sadd.s32 %s45, 1
    %s47 = scalar_select %p44, %s45, %s46
    %p50 = pneg %p44
    %p51 = scmp.eq.s32.totalorder %s9, 1
    %p52 = por %p50, %p51
    %p53 = scmp.ne.s32.totalorder %s45, %s48
    %p54 = scmp.eq.s32.totalorder %s9, 0
    %p55 = por %p53, %p54
    %p56 = scmp.ne.s32.totalorder %s45, %s48
    %p57 = scmp.eq.s32.totalorder %s14, 1
    %p58 = por %p56, %p57
    %p59 = scmp.ne.s32.totalorder %s48, %s49
    %p60 = scmp.eq.s32.totalorder %s14, 0
    %p61 = por %p59, %p60
    %p62 = scmp.ne.s32.totalorder %s48, %s49
    %p63 = scmp.eq.s32.totalorder %s15, 1
    %p64 = por %p62, %p63
    %p66 = scmp.ne.s32.totalorder %s49, %s65
    %p67 = scmp.eq.s32.totalorder %s15, 0
    %p68 = por %p66, %p67
    %s69 = ssub.s32 %s9, %s16
    %p70 = scmp.eq.s32.totalorder %s69, 0
    %s72 = sadd.s32 %s71, 1
    %s73 = scalar_select %p70, %s71, %s72
    %p76 = pneg %p70
    %p77 = scmp.eq.s32.totalorder %s9, 1
    %p78 = por %p76, %p77
    %p79 = scmp.ne.s32.totalorder %s71, %s74
    %p80 = scmp.eq.s32.totalorder %s9, 0
    %p81 = por %p79, %p80
    %p82 = scmp.ne.s32.totalorder %s71, %s74
    %p83 = scmp.eq.s32.totalorder %s14, 1
    %p84 = por %p82, %p83
    %p85 = scmp.ne.s32.totalorder %s74, %s75
    %p86 = scmp.eq.s32.totalorder %s14, 0
    %p87 = por %p85, %p86
    %p88 = scmp.ne.s32.totalorder %s74, %s75
    %p89 = scmp.eq.s32.totalorder %s15, 1
    %p90 = por %p88, %p89
    %p92 = scmp.ne.s32.totalorder %s75, %s91
    %p93 = scmp.eq.s32.totalorder %s15, 0
    %p94 = por %p92, %p93
    %s95 = ssub.s32 %s9, %s16
    %p96 = scmp.eq.s32.totalorder %s95, 0
    %s98 = sadd.s32 %s97, 1
    %s99 = scalar_select %p96, %s97, %s98
    %p102 = pneg %p96
    %p103 = scmp.eq.s32.totalorder %s9, 1
    %p104 = por %p102, %p103
    %p105 = scmp.ne.s32.totalorder %s97, %s100
    %p106 = scmp.eq.s32.totalorder %s9, 0
    %p107 = por %p105, %p106
    %p108 = scmp.ne.s32.totalorder %s97, %s100
    %p109 = scmp.eq.s32.totalorder %s14, 1
    %p110 = por %p108, %p109
    %p111 = scmp.ne.s32.totalorder %s100, %s101
    %p112 = scmp.eq.s32.totalorder %s14, 0
    %p113 = por %p111, %p112
    %p114 = scmp.ne.s32.totalorder %s100, %s101
    %p115 = scmp.eq.s32.totalorder %s15, 1
    %p116 = por %p114, %p115
    %p118 = scmp.ne.s32.totalorder %s101, %s117
    %p119 = scmp.eq.s32.totalorder %s15, 0
    %p120 = por %p118, %p119
    %p121 = scmp.le.s32.totalorder 1, %s9
    %p122 = scmp.lt.s32.totalorder %s9, 3
    %p123 = pnand %p121, %p122
    %p124 = pneg %p123
    // Predicated region
    $region9: #{cross_attention.8} parent=5 // pred_check
      _
    $region10: #{cross_attention.8} parent=5 // pred_check_branch
      %126 = sbr.rel (%p123) target = $region12
    $region11: #{cross_attention.8} parent=5 // pred_region
      %s127 = ssub.s32 %s9, 1
    $region12: #{cross_attention.8} parent=5 // pred_fallthru
      _
    %p128 = scmp.lt.s32.totalorder %s9, 2
    // Predicated region
    $region13: #{cross_attention.8} parent=5 // pred_check
      %p129 = pneg %p128
    $region14: #{cross_attention.8} parent=5 // pred_check_branch
      %131 = sbr.rel (%p129) target = $region16
    $region15: #{cross_attention.8} parent=5 // pred_region
      // Predicated region
      $region17: #{cross_attention.8} parent=15 // pred_check
        %p132 = pneg %p29
      $region18: #{cross_attention.8} parent=15 // pred_check_branch
        %134 = sbr.rel (%p132) target = $region20
      $region19: #{cross_attention.8} parent=15 // pred_region
        %p135 = scmp.lt.s32.totalorder %s9, 1
        %s136 = scalar_select %p135, %s9, 1
        %s137 = smul.addr %s136, 4
        %s138 = smul.addr %s137, 8
        %s139 = scalar_lea.vmem %s0, %s138
      $region20: #{cross_attention.8} parent=15 // pred_fallthru
        _
      // Predicated region
      $region21: #{cross_attention.8} parent=15 // pred_check
        %p140 = pneg %p55
      $region22: #{cross_attention.8} parent=15 // pred_check_branch
        %142 = sbr.rel (%p140) target = $region24
      $region23: #{cross_attention.8} parent=15 // pred_region
        %p143 = scmp.lt.s32.totalorder %s9, 1
        %s144 = scalar_select %p143, %s9, 1
        %s145 = smul.addr %s144, 8
        %s146 = smul.addr %s145, 8
        %s147 = scalar_lea.vmem %s1, %s146
      $region24: #{cross_attention.8} parent=15 // pred_fallthru
        _
      // Predicated region
      $region25: #{cross_attention.8} parent=15 // pred_check
        %p148 = pneg %p81
      $region26: #{cross_attention.8} parent=15 // pred_check_branch
        %150 = sbr.rel (%p148) target = $region28
      $region27: #{cross_attention.8} parent=15 // pred_region
        %p151 = scmp.lt.s32.totalorder %s9, 1
        %s152 = scalar_select %p151, %s9, 1
        %s153 = smul.addr %s152, 8
        %s154 = smul.addr %s153, 8
        %s155 = scalar_lea.vmem %s2, %s154
      $region28: #{cross_attention.8} parent=15 // pred_fallthru
        _
    $region16: #{cross_attention.8} parent=5 // pred_fallthru
      _
    %p156 = scmp.le.s32.totalorder 1, %s9
    %p157 = scmp.lt.s32.totalorder %s9, 3
    %p158 = pnand %p156, %p157
    %p159 = pneg %p158
    // Predicated region
    $region29: #{cross_attention.8} parent=5 // pred_check
      _
    $region30: #{cross_attention.8} parent=5 // pred_check_branch
      %161 = sbr.rel (%p158) target = $region32
    $region31: #{cross_attention.8} parent=5 // pred_region
      %s162 = ssub.s32 %s9, 1
      %p163 = scmp.lt.s32.totalorder %s14, 1
      %s164 = scalar_select %p163, %s14, 1
      %s165 = smul.addr %s164, 4
      %s166 = smul.addr %s165, 8
      %s167 = scalar_lea.vmem %s0, %s166
      %p168 = pneg %p35
      %p169 = pneg %p32
      %p170 = scmp.lt.s32.totalorder %s14, 1
      %s171 = scalar_select %p170, %s14, 1
      %s172 = smul.addr %s171, 8
      %s173 = smul.addr %s172, 8
      %s174 = scalar_lea.vmem %s1, %s173
      %p175 = pneg %p61
      %p176 = pneg %p58
      %p177 = scmp.lt.s32.totalorder %s14, 1
      %s178 = scalar_select %p177, %s14, 1
      %s179 = smul.addr %s178, 8
      %s180 = smul.addr %s179, 8
      %s181 = scalar_lea.vmem %s2, %s180
      %p182 = pneg %p87
      %p183 = pneg %p84
      %p184 = pneg %p113
      %p185 = pneg %p110
      %p186 = scmp.lt.s32.totalorder %s14, 1
      %s187 = scalar_select %p186, %s14, 1
      %s188 = smul.addr %s187, 4
      %s189 = smul.addr %s188, 8
      %s190 = scalar_lea.vmem %s3, %s189
      %p191 = scmp.lt.s32.totalorder %s14, 1
      %s192 = scalar_select %p191, %s14, 1
      %s193 = smul.addr %s192, 4
      %s194 = smul.addr %s193, 8
      %s195 = scalar_lea.vmem %s0, %s194
      %p196 = scmp.lt.s32.totalorder %s14, 1
      %s197 = scalar_select %p196, %s14, 1
      %s198 = smul.addr %s197, 8
      %s199 = smul.addr %s198, 8
      %s200 = scalar_lea.vmem %s1, %s199
      %p201 = scmp.lt.s32.totalorder %s14, 1
      %s202 = scalar_select %p201, %s14, 1
      %s203 = smul.addr %s202, 8
      %s204 = smul.addr %s203, 8
      %s205 = scalar_lea.vmem %s2, %s204
      %p206 = scmp.lt.s32.totalorder %s14, 1
      %s207 = scalar_select %p206, %s14, 1
      %s208 = smul.addr %s207, 4
      %s209 = smul.addr %s208, 8
      %s210 = scalar_lea.vmem %s3, %s209
      %v211 = vld [vmem:[%s195] sm:$0xff]
      %v212 = vld [vmem:[%s195 + $0x8] sm:$0xff]
      %v213 = vld [vmem:[%s195 + $0x10] sm:$0xff]
      %v214 = vld [vmem:[%s195 + $0x18] sm:$0xff]
      %v215 = vld [vmem:[%s200] sm:$0xff]
      %v216 = vld [vmem:[%s200 + $0x8] sm:$0xff]
      %v217 = vld [vmem:[%s200 + $0x10] sm:$0xff]
      %v218 = vld [vmem:[%s200 + $0x18] sm:$0xff]
      %v219 = vld [vmem:[%s200 + $0x20] sm:$0xff]
      %v220 = vld [vmem:[%s200 + $0x28] sm:$0xff]
      %v221 = vld [vmem:[%s200 + $0x30] sm:$0xff]
      %v222 = vld [vmem:[%s200 + $0x38] sm:$0xff]
      %v223 = vld [vmem:[%s205] sm:$0xff]
      %v224 = vld [vmem:[%s205 + $0x8] sm:$0xff]
      %v225 = vld [vmem:[%s205 + $0x10] sm:$0xff]
      %v226 = vld [vmem:[%s205 + $0x18] sm:$0xff]
      %v227 = vld [vmem:[%s205 + $0x20] sm:$0xff]
      %v228 = vld [vmem:[%s205 + $0x28] sm:$0xff]
      %v229 = vld [vmem:[%s205 + $0x30] sm:$0xff]
      %v230 = vld [vmem:[%s205 + $0x38] sm:$0xff]
      %vm231 = vcmask 64512
      %v233 = vsel %vm231, %v211, 0
      %v236 = vsel %vm231, %v215, 0
      %v239 = vsel %vm231, %v216, 0
      %241 = vmatprep.subr.mxu0 0.0
      %242 = vmatpush1.xpose.msra.mxu0 %v236
      %243 = vmatprep.subr.mxu0 0.0
      %244 = vmatpush1.xpose.msra.mxu0 %v239
      %245 = vmatprep.subr.mxu0 0.0
      %246 = vmatpush1.xpose.msra.mxu0 0.0
      %247 = vmatprep.subr.mxu0 0.0
      %248 = vmatpush1.xpose.msra.mxu0 0.0
      %249 = vmatprep.subr.mxu0 0.0
      %250 = vmatpush1.xpose.msra.mxu0 0.0
      %251 = vmatprep.subr.mxu0 0.0
      %252 = vmatpush1.xpose.msra.mxu0 0.0
      %253 = vmatprep.subr.mxu0 0.0
      %254 = vmatpush1.xpose.msra.mxu0 0.0
      %255 = vmatprep.subr.mxu0 0.0
      %256 = vmatpush1.xpose.msra.mxu0 0.0
      %257 = vmatprep.subr.mxu0 0.0
      %258 = vmatpush1.xpose.msra.mxu0 0.0
      %259 = vmatprep.subr.mxu0 0.0
      %260 = vmatpush1.xpose.msra.mxu0 0.0
      %261 = vmatprep.subr.mxu0 0.0
      %262 = vmatpush1.xpose.msra.mxu0 0.0
      %263 = vmatprep.subr.mxu0 0.0
      %264 = vmatpush1.xpose.msra.mxu0 0.0
      %265 = vmatprep.subr.mxu0 0.0
      %266 = vmatpush1.xpose.msra.mxu0 0.0
      %267 = vmatprep.subr.mxu0 0.0
      %268 = vmatpush1.xpose.msra.mxu0 0.0
      %269 = vmatprep.subr.mxu0 0.0
      %270 = vmatpush1.xpose.msra.mxu0 0.0
      %271 = vmatprep.subr.mxu0 0.0
      %272 = vmatpush1.xpose.msra.mxu0 0.0
      %273 = vmatprep.subr.mxu0 0.0
      %274 = vmatpush1.xpose.msra.mxu0 0.0
      %275 = vmatprep.subr.mxu0 0.0
      %276 = vmatpush1.xpose.msra.mxu0 0.0
      %277 = vmatprep.subr.mxu0 0.0
      %278 = vmatpush1.xpose.msra.mxu0 0.0
      %279 = vmatprep.subr.mxu0 0.0
      %280 = vmatpush1.xpose.msra.mxu0 0.0
      %281 = vmatprep.subr.mxu0 0.0
      %282 = vmatpush1.xpose.msra.mxu0 0.0
      %283 = vmatprep.subr.mxu0 0.0
      %284 = vmatpush1.xpose.msra.mxu0 0.0
      %285 = vmatprep.subr.mxu0 0.0
      %286 = vmatpush1.xpose.msra.mxu0 0.0
      %287 = vmatprep.subr.mxu0 0.0
      %288 = vmatpush1.xpose.msra.mxu0 0.0
      %289 = vmatprep.subr.mxu0 0.0
      %290 = vmatpush1.xpose.msra.mxu0 0.0
      %291 = vmatprep.subr.mxu0 0.0
      %292 = vmatpush1.xpose.msra.mxu0 0.0
      %293 = vmatprep.subr.mxu0 0.0
      %294 = vmatpush1.xpose.msra.mxu0 0.0
      %295 = vmatprep.subr.mxu0 0.0
      %296 = vmatpush1.xpose.msra.mxu0 0.0
      %297 = vmatprep.subr.mxu0 0.0
      %298 = vmatpush1.xpose.msra.mxu0 0.0
      %299 = vmatprep.subr.mxu0 0.0
      %300 = vmatpush1.xpose.msra.mxu0 0.0
      %301 = vmatprep.subr.mxu0 0.0
      %302 = vmatpush1.xpose.msra.mxu0 0.0
      %303 = vmatprep.subr.mxu0 0.0
      %304 = vmatpush1.xpose.msra.mxu0 0.0
      %305 = vmatprep.mubr.f32.mxu0 0.0
      %306 = vmatmul.mubr.f32.gmra.mrb[0].mxu0 %v233
      %v307 = vpop.f32.mrb[0].mxu0
      %v308 = vadd.f32 0.0, %v307
      %v309 = vpop.f32.mrb[0].mxu0
      %310 = vdwg.mxu0
      %v312 = vsel %vm231, %v212, 0
      %v315 = vsel %vm231, %v217, 0
      %v318 = vsel %vm231, %v218, 0
      %320 = vmatprep.subr.mxu0 0.0
      %321 = vmatpush1.xpose.msra.mxu0 %v315
      %322 = vmatprep.subr.mxu0 0.0
      %323 = vmatpush1.xpose.msra.mxu0 %v318
      %324 = vmatprep.subr.mxu0 0.0
      %325 = vmatpush1.xpose.msra.mxu0 0.0
      %326 = vmatprep.subr.mxu0 0.0
      %327 = vmatpush1.xpose.msra.mxu0 0.0
      %328 = vmatprep.subr.mxu0 0.0
      %329 = vmatpush1.xpose.msra.mxu0 0.0
      %330 = vmatprep.subr.mxu0 0.0
      %331 = vmatpush1.xpose.msra.mxu0 0.0
      %332 = vmatprep.subr.mxu0 0.0
      %333 = vmatpush1.xpose.msra.mxu0 0.0
      %334 = vmatprep.subr.mxu0 0.0
      %335 = vmatpush1.xpose.msra.mxu0 0.0
      %336 = vmatprep.subr.mxu0 0.0
      %337 = vmatpush1.xpose.msra.mxu0 0.0
      %338 = vmatprep.subr.mxu0 0.0
      %339 = vmatpush1.xpose.msra.mxu0 0.0
      %340 = vmatprep.subr.mxu0 0.0
      %341 = vmatpush1.xpose.msra.mxu0 0.0
      %342 = vmatprep.subr.mxu0 0.0
      %343 = vmatpush1.xpose.msra.mxu0 0.0
      %344 = vmatprep.subr.mxu0 0.0
      %345 = vmatpush1.xpose.msra.mxu0 0.0
      %346 = vmatprep.subr.mxu0 0.0
      %347 = vmatpush1.xpose.msra.mxu0 0.0
      %348 = vmatprep.subr.mxu0 0.0
      %349 = vmatpush1.xpose.msra.mxu0 0.0
      %350 = vmatprep.subr.mxu0 0.0
      %351 = vmatpush1.xpose.msra.mxu0 0.0
      %352 = vmatprep.subr.mxu0 0.0
      %353 = vmatpush1.xpose.msra.mxu0 0.0
      %354 = vmatprep.subr.mxu0 0.0
      %355 = vmatpush1.xpose.msra.mxu0 0.0
      %356 = vmatprep.subr.mxu0 0.0
      %357 = vmatpush1.xpose.msra.mxu0 0.0
      %358 = vmatprep.subr.mxu0 0.0
      %359 = vmatpush1.xpose.msra.mxu0 0.0
      %360 = vmatprep.subr.mxu0 0.0
      %361 = vmatpush1.xpose.msra.mxu0 0.0
      %362 = vmatprep.subr.mxu0 0.0
      %363 = vmatpush1.xpose.msra.mxu0 0.0
      %364 = vmatprep.subr.mxu0 0.0
      %365 = vmatpush1.xpose.msra.mxu0 0.0
      %366 = vmatprep.subr.mxu0 0.0
      %367 = vmatpush1.xpose.msra.mxu0 0.0
      %368 = vmatprep.subr.mxu0 0.0
      %369 = vmatpush1.xpose.msra.mxu0 0.0
      %370 = vmatprep.subr.mxu0 0.0
      %371 = vmatpush1.xpose.msra.mxu0 0.0
      %372 = vmatprep.subr.mxu0 0.0
      %373 = vmatpush1.xpose.msra.mxu0 0.0
      %374 = vmatprep.subr.mxu0 0.0
      %375 = vmatpush1.xpose.msra.mxu0 0.0
      %376 = vmatprep.subr.mxu0 0.0
      %377 = vmatpush1.xpose.msra.mxu0 0.0
      %378 = vmatprep.subr.mxu0 0.0
      %379 = vmatpush1.xpose.msra.mxu0 0.0
      %380 = vmatprep.subr.mxu0 0.0
      %381 = vmatpush1.xpose.msra.mxu0 0.0
      %382 = vmatprep.subr.mxu0 0.0
      %383 = vmatpush1.xpose.msra.mxu0 0.0
      %384 = vmatprep.mubr.f32.mxu0 0.0
      %385 = vmatmul.mubr.f32.gmra.mrb[0].mxu0 %v312
      %v386 = vpop.f32.mrb[0].mxu0
      %v387 = vadd.f32 0.0, %v386
      %v388 = vpop.f32.mrb[0].mxu0
      %389 = vdwg.mxu0
      %v391 = vsel %vm231, %v213, 0
      %v394 = vsel %vm231, %v219, 0
      %v397 = vsel %vm231, %v220, 0
      %399 = vmatprep.subr.mxu0 0.0
      %400 = vmatpush1.xpose.msra.mxu0 %v394
      %401 = vmatprep.subr.mxu0 0.0
      %402 = vmatpush1.xpose.msra.mxu0 %v397
      %403 = vmatprep.subr.mxu0 0.0
      %404 = vmatpush1.xpose.msra.mxu0 0.0
      %405 = vmatprep.subr.mxu0 0.0
      %406 = vmatpush1.xpose.msra.mxu0 0.0
      %407 = vmatprep.subr.mxu0 0.0
      %408 = vmatpush1.xpose.msra.mxu0 0.0
      %409 = vmatprep.subr.mxu0 0.0
      %410 = vmatpush1.xpose.msra.mxu0 0.0
      %411 = vmatprep.subr.mxu0 0.0
      %412 = vmatpush1.xpose.msra.mxu0 0.0
      %413 = vmatprep.subr.mxu0 0.0
      %414 = vmatpush1.xpose.msra.mxu0 0.0
      %415 = vmatprep.subr.mxu0 0.0
      %416 = vmatpush1.xpose.msra.mxu0 0.0
      %417 = vmatprep.subr.mxu0 0.0
      %418 = vmatpush1.xpose.msra.mxu0 0.0
      %419 = vmatprep.subr.mxu0 0.0
      %420 = vmatpush1.xpose.msra.mxu0 0.0
      %421 = vmatprep.subr.mxu0 0.0
      %422 = vmatpush1.xpose.msra.mxu0 0.0
      %423 = vmatprep.subr.mxu0 0.0
      %424 = vmatpush1.xpose.msra.mxu0 0.0
      %425 = vmatprep.subr.mxu0 0.0
      %426 = vmatpush1.xpose.msra.mxu0 0.0
      %427 = vmatprep.subr.mxu0 0.0
      %428 = vmatpush1.xpose.msra.mxu0 0.0
      %429 = vmatprep.subr.mxu0 0.0
      %430 = vmatpush1.xpose.msra.mxu0 0.0
      %431 = vmatprep.subr.mxu0 0.0
      %432 = vmatpush1.xpose.msra.mxu0 0.0
      %433 = vmatprep.subr.mxu0 0.0
      %434 = vmatpush1.xpose.msra.mxu0 0.0
      %435 = vmatprep.subr.mxu0 0.0
      %436 = vmatpush1.xpose.msra.mxu0 0.0
      %437 = vmatprep.subr.mxu0 0.0
      %438 = vmatpush1.xpose.msra.mxu0 0.0
      %439 = vmatprep.subr.mxu0 0.0
      %440 = vmatpush1.xpose.msra.mxu0 0.0
      %441 = vmatprep.subr.mxu0 0.0
      %442 = vmatpush1.xpose.msra.mxu0 0.0
      %443 = vmatprep.subr.mxu0 0.0
      %444 = vmatpush1.xpose.msra.mxu0 0.0
      %445 = vmatprep.subr.mxu0 0.0
      %446 = vmatpush1.xpose.msra.mxu0 0.0
      %447 = vmatprep.subr.mxu0 0.0
      %448 = vmatpush1.xpose.msra.mxu0 0.0
      %449 = vmatprep.subr.mxu0 0.0
      %450 = vmatpush1.xpose.msra.mxu0 0.0
      %451 = vmatprep.subr.mxu0 0.0
      %452 = vmatpush1.xpose.msra.mxu0 0.0
      %453 = vmatprep.subr.mxu0 0.0
      %454 = vmatpush1.xpose.msra.mxu0 0.0
      %455 = vmatprep.subr.mxu0 0.0
      %456 = vmatpush1.xpose.msra.mxu0 0.0
      %457 = vmatprep.subr.mxu0 0.0
      %458 = vmatpush1.xpose.msra.mxu0 0.0
      %459 = vmatprep.subr.mxu0 0.0
      %460 = vmatpush1.xpose.msra.mxu0 0.0
      %461 = vmatprep.subr.mxu0 0.0
      %462 = vmatpush1.xpose.msra.mxu0 0.0
      %463 = vmatprep.mubr.f32.mxu0 0.0
      %464 = vmatmul.mubr.f32.gmra.mrb[0].mxu0 %v391
      %v465 = vpop.f32.mrb[0].mxu0
      %v466 = vadd.f32 0.0, %v465
      %v467 = vpop.f32.mrb[0].mxu0
      %468 = vdwg.mxu0
      %v470 = vsel %vm231, %v214, 0
      %v473 = vsel %vm231, %v221, 0
      %v476 = vsel %vm231, %v222, 0
      %478 = vmatprep.subr.mxu0 0.0
      %479 = vmatpush1.xpose.msra.mxu0 %v473
      %480 = vmatprep.subr.mxu0 0.0
      %481 = vmatpush1.xpose.msra.mxu0 %v476
      %482 = vmatprep.subr.mxu0 0.0
      %483 = vmatpush1.xpose.msra.mxu0 0.0
      %484 = vmatprep.subr.mxu0 0.0
      %485 = vmatpush1.xpose.msra.mxu0 0.0
      %486 = vmatprep.subr.mxu0 0.0
      %487 = vmatpush1.xpose.msra.mxu0 0.0
      %488 = vmatprep.subr.mxu0 0.0
      %489 = vmatpush1.xpose.msra.mxu0 0.0
      %490 = vmatprep.subr.mxu0 0.0
      %491 = vmatpush1.xpose.msra.mxu0 0.0
      %492 = vmatprep.subr.mxu0 0.0
      %493 = vmatpush1.xpose.msra.mxu0 0.0
      %494 = vmatprep.subr.mxu0 0.0
      %495 = vmatpush1.xpose.msra.mxu0 0.0
      %496 = vmatprep.subr.mxu0 0.0
      %497 = vmatpush1.xpose.msra.mxu0 0.0
      %498 = vmatprep.subr.mxu0 0.0
      %499 = vmatpush1.xpose.msra.mxu0 0.0
      %500 = vmatprep.subr.mxu0 0.0
      %501 = vmatpush1.xpose.msra.mxu0 0.0
      %502 = vmatprep.subr.mxu0 0.0
      %503 = vmatpush1.xpose.msra.mxu0 0.0
      %504 = vmatprep.subr.mxu0 0.0
      %505 = vmatpush1.xpose.msra.mxu0 0.0
      %506 = vmatprep.subr.mxu0 0.0
      %507 = vmatpush1.xpose.msra.mxu0 0.0
      %508 = vmatprep.subr.mxu0 0.0
      %509 = vmatpush1.xpose.msra.mxu0 0.0
      %510 = vmatprep.subr.mxu0 0.0
      %511 = vmatpush1.xpose.msra.mxu0 0.0
      %512 = vmatprep.subr.mxu0 0.0
      %513 = vmatpush1.xpose.msra.mxu0 0.0
      %514 = vmatprep.subr.mxu0 0.0
      %515 = vmatpush1.xpose.msra.mxu0 0.0
      %516 = vmatprep.subr.mxu0 0.0
      %517 = vmatpush1.xpose.msra.mxu0 0.0
      %518 = vmatprep.subr.mxu0 0.0
      %519 = vmatpush1.xpose.msra.mxu0 0.0
      %520 = vmatprep.subr.mxu0 0.0
      %521 = vmatpush1.xpose.msra.mxu0 0.0
      %522 = vmatprep.subr.mxu0 0.0
      %523 = vmatpush1.xpose.msra.mxu0 0.0
      %524 = vmatprep.subr.mxu0 0.0
      %525 = vmatpush1.xpose.msra.mxu0 0.0
      %526 = vmatprep.subr.mxu0 0.0
      %527 = vmatpush1.xpose.msra.mxu0 0.0
      %528 = vmatprep.subr.mxu0 0.0
      %529 = vmatpush1.xpose.msra.mxu0 0.0
      %530 = vmatprep.subr.mxu0 0.0
      %531 = vmatpush1.xpose.msra.mxu0 0.0
      %532 = vmatprep.subr.mxu0 0.0
      %533 = vmatpush1.xpose.msra.mxu0 0.0
      %534 = vmatprep.subr.mxu0 0.0
      %535 = vmatpush1.xpose.msra.mxu0 0.0
      %536 = vmatprep.subr.mxu0 0.0
      %537 = vmatpush1.xpose.msra.mxu0 0.0
      %538 = vmatprep.subr.mxu0 0.0
      %539 = vmatpush1.xpose.msra.mxu0 0.0
      %540 = vmatprep.subr.mxu0 0.0
      %541 = vmatpush1.xpose.msra.mxu0 0.0
      %542 = vmatprep.mubr.f32.mxu0 0.0
      %543 = vmatmul.mubr.f32.gmra.mrb[0].mxu0 %v470
      %v544 = vpop.f32.mrb[0].mxu0
      %v545 = vadd.f32 0.0, %v544
      %v546 = vpop.f32.mrb[0].mxu0
      %547 = vdwg.mxu0
      %v548 = vmul.f32 %v308, 0.35355338
      %v549 = vmul.f32 %v387, 0.35355338
      %v550 = vmul.f32 %v466, 0.35355338
      %v551 = vmul.f32 %v545, 0.35355338
      %vm552 = vcmask 130048
      %v553 = vsel %vm552, %v548, -inf
      %554 = vmax.xlane.f32.xlu0 %v553
      %v555 = vpop.xlane.xlu0 %554
      %v556 = vsel %vm552, %v549, -inf
      %557 = vmax.xlane.f32.xlu0 %v556
      %v558 = vpop.xlane.xlu0 %557
      %v559 = vsel %vm552, %v550, -inf
      %560 = vmax.xlane.f32.xlu0 %v559
      %v561 = vpop.xlane.xlu0 %560
      %v562 = vsel %vm552, %v551, -inf
      %563 = vmax.xlane.f32.xlu0 %v562
      %v564 = vpop.xlane.xlu0 %563
      %v565 = vsub.f32 %v548, %v555
      %v566 = vsub.f32 %v549, %v558
      %v567 = vsub.f32 %v550, %v561
      %v568 = vsub.f32 %v551, %v564
      %v569 = vmul.f32 %v565, 1.442695
      %v570 = vpow.pop %v569
      %v571 = vmul.f32 %v566, 1.442695
      %v572 = vpow.pop %v571
      %v573 = vmul.f32 %v567, 1.442695
      %v574 = vpow.pop %v573
      %v575 = vmul.f32 %v568, 1.442695
      %v576 = vpow.pop %v575
      %v577 = vsel %vm552, %v570, 0.0
      %578 = vadd.xlane.f32.xlu0 %v577
      %v579 = vpop.xlane.xlu0 %578
      %v580 = vsel %vm552, %v572, 0.0
      %581 = vadd.xlane.f32.xlu0 %v580
      %v582 = vpop.xlane.xlu0 %581
      %v583 = vsel %vm552, %v574, 0.0
      %584 = vadd.xlane.f32.xlu0 %v583
      %v585 = vpop.xlane.xlu0 %584
      %v586 = vsel %vm552, %v576, 0.0
      %587 = vadd.xlane.f32.xlu0 %v586
      %v588 = vpop.xlane.xlu0 %587
      %v589 = vrcp.pop %v579
      %v590 = vmul.f32 %v570, %v589
      %v591 = vrcp.pop %v582
      %v592 = vmul.f32 %v572, %v591
      %v593 = vrcp.pop %v585
      %v594 = vmul.f32 %v574, %v593
      %v595 = vrcp.pop %v588
      %v596 = vmul.f32 %v576, %v595
      %v598 = vsel %vm552, %v590, 0
      %600 = vmatprep.subr.mxu0 0.0
      %601 = vmatpush1.msra.mxu0 %v223
      %602 = vmatprep.subr.mxu0 0.0
      %603 = vmatpush1.msra.mxu0 %v224
      %604 = vmatprep.subr.mxu0 0.0
      %605 = vmatpush1.msra.mxu0 0.0
      %606 = vmatprep.subr.mxu0 0.0
      %607 = vmatpush1.msra.mxu0 0.0
      %608 = vmatprep.subr.mxu0 0.0
      %609 = vmatpush1.msra.mxu0 0.0
      %610 = vmatprep.subr.mxu0 0.0
      %611 = vmatpush1.msra.mxu0 0.0
      %612 = vmatprep.subr.mxu0 0.0
      %613 = vmatpush1.msra.mxu0 0.0
      %614 = vmatprep.subr.mxu0 0.0
      %615 = vmatpush1.msra.mxu0 0.0
      %616 = vmatprep.subr.mxu0 0.0
      %617 = vmatpush1.msra.mxu0 0.0
      %618 = vmatprep.subr.mxu0 0.0
      %619 = vmatpush1.msra.mxu0 0.0
      %620 = vmatprep.subr.mxu0 0.0
      %621 = vmatpush1.msra.mxu0 0.0
      %622 = vmatprep.subr.mxu0 0.0
      %623 = vmatpush1.msra.mxu0 0.0
      %624 = vmatprep.subr.mxu0 0.0
      %625 = vmatpush1.msra.mxu0 0.0
      %626 = vmatprep.subr.mxu0 0.0
      %627 = vmatpush1.msra.mxu0 0.0
      %628 = vmatprep.subr.mxu0 0.0
      %629 = vmatpush1.msra.mxu0 0.0
      %630 = vmatprep.subr.mxu0 0.0
      %631 = vmatpush1.msra.mxu0 0.0
      %632 = vmatprep.subr.mxu0 0.0
      %633 = vmatpush1.msra.mxu0 0.0
      %634 = vmatprep.subr.mxu0 0.0
      %635 = vmatpush1.msra.mxu0 0.0
      %636 = vmatprep.subr.mxu0 0.0
      %637 = vmatpush1.msra.mxu0 0.0
      %638 = vmatprep.subr.mxu0 0.0
      %639 = vmatpush1.msra.mxu0 0.0
      %640 = vmatprep.subr.mxu0 0.0
      %641 = vmatpush1.msra.mxu0 0.0
      %642 = vmatprep.subr.mxu0 0.0
      %643 = vmatpush1.msra.mxu0 0.0
      %644 = vmatprep.subr.mxu0 0.0
      %645 = vmatpush1.msra.mxu0 0.0
      %646 = vmatprep.subr.mxu0 0.0
      %647 = vmatpush1.msra.mxu0 0.0
      %648 = vmatprep.subr.mxu0 0.0
      %649 = vmatpush1.msra.mxu0 0.0
      %650 = vmatprep.subr.mxu0 0.0
      %651 = vmatpush1.msra.mxu0 0.0
      %652 = vmatprep.subr.mxu0 0.0
      %653 = vmatpush1.msra.mxu0 0.0
      %654 = vmatprep.subr.mxu0 0.0
      %655 = vmatpush1.msra.mxu0 0.0
      %656 = vmatprep.subr.mxu0 0.0
      %657 = vmatpush1.msra.mxu0 0.0
      %658 = vmatprep.subr.mxu0 0.0
      %659 = vmatpush1.msra.mxu0 0.0
      %660 = vmatprep.subr.mxu0 0.0
      %661 = vmatpush1.msra.mxu0 0.0
      %662 = vmatprep.subr.mxu0 0.0
      %663 = vmatpush1.msra.mxu0 0.0
      %664 = vmatprep.mubr.f32.mxu0 0.0
      %665 = vmatmul.mubr.f32.gmra.mrb[0].mxu0 %v598
      %v666 = vpop.f32.mrb[0].mxu0
      %v667 = vadd.f32 0.0, %v666
      %v668 = vpop.f32.mrb[0].mxu0
      %669 = vdwg.mxu0
      %v671 = vsel %vm552, %v592, 0
      %673 = vmatprep.subr.mxu0 0.0
      %674 = vmatpush1.msra.mxu0 %v225
      %675 = vmatprep.subr.mxu0 0.0
      %676 = vmatpush1.msra.mxu0 %v226
      %677 = vmatprep.subr.mxu0 0.0
      %678 = vmatpush1.msra.mxu0 0.0
      %679 = vmatprep.subr.mxu0 0.0
      %680 = vmatpush1.msra.mxu0 0.0
      %681 = vmatprep.subr.mxu0 0.0
      %682 = vmatpush1.msra.mxu0 0.0
      %683 = vmatprep.subr.mxu0 0.0
      %684 = vmatpush1.msra.mxu0 0.0
      %685 = vmatprep.subr.mxu0 0.0
      %686 = vmatpush1.msra.mxu0 0.0
      %687 = vmatprep.subr.mxu0 0.0
      %688 = vmatpush1.msra.mxu0 0.0
      %689 = vmatprep.subr.mxu0 0.0
      %690 = vmatpush1.msra.mxu0 0.0
      %691 = vmatprep.subr.mxu0 0.0
      %692 = vmatpush1.msra.mxu0 0.0
      %693 = vmatprep.subr.mxu0 0.0
      %694 = vmatpush1.msra.mxu0 0.0
      %695 = vmatprep.subr.mxu0 0.0
      %696 = vmatpush1.msra.mxu0 0.0
      %697 = vmatprep.subr.mxu0 0.0
      %698 = vmatpush1.msra.mxu0 0.0
      %699 = vmatprep.subr.mxu0 0.0
      %700 = vmatpush1.msra.mxu0 0.0
      %701 = vmatprep.subr.mxu0 0.0
      %702 = vmatpush1.msra.mxu0 0.0
      %703 = vmatprep.subr.mxu0 0.0
      %704 = vmatpush1.msra.mxu0 0.0
      %705 = vmatprep.subr.mxu0 0.0
      %706 = vmatpush1.msra.mxu0 0.0
      %707 = vmatprep.subr.mxu0 0.0
      %708 = vmatpush1.msra.mxu0 0.0
      %709 = vmatprep.subr.mxu0 0.0
      %710 = vmatpush1.msra.mxu0 0.0
      %711 = vmatprep.subr.mxu0 0.0
      %712 = vmatpush1.msra.mxu0 0.0
      %713 = vmatprep.subr.mxu0 0.0
      %714 = vmatpush1.msra.mxu0 0.0
      %715 = vmatprep.subr.mxu0 0.0
      %716 = vmatpush1.msra.mxu0 0.0
      %717 = vmatprep.subr.mxu0 0.0
      %718 = vmatpush1.msra.mxu0 0.0
      %719 = vmatprep.subr.mxu0 0.0
      %720 = vmatpush1.msra.mxu0 0.0
      %721 = vmatprep.subr.mxu0 0.0
      %722 = vmatpush1.msra.mxu0 0.0
      %723 = vmatprep.subr.mxu0 0.0
      %724 = vmatpush1.msra.mxu0 0.0
      %725 = vmatprep.subr.mxu0 0.0
      %726 = vmatpush1.msra.mxu0 0.0
      %727 = vmatprep.subr.mxu0 0.0
      %728 = vmatpush1.msra.mxu0 0.0
      %729 = vmatprep.subr.mxu0 0.0
      %730 = vmatpush1.msra.mxu0 0.0
      %731 = vmatprep.subr.mxu0 0.0
      %732 = vmatpush1.msra.mxu0 0.0
      %733 = vmatprep.subr.mxu0 0.0
      %734 = vmatpush1.msra.mxu0 0.0
      %735 = vmatprep.subr.mxu0 0.0
      %736 = vmatpush1.msra.mxu0 0.0
      %737 = vmatprep.mubr.f32.mxu0 0.0
      %738 = vmatmul.mubr.f32.gmra.mrb[0].mxu0 %v671
      %v739 = vpop.f32.mrb[0].mxu0
      %v740 = vadd.f32 0.0, %v739
      %v741 = vpop.f32.mrb[0].mxu0
      %742 = vdwg.mxu0
      %v744 = vsel %vm552, %v594, 0
      %746 = vmatprep.subr.mxu0 0.0
      %747 = vmatpush1.msra.mxu0 %v227
      %748 = vmatprep.subr.mxu0 0.0
      %749 = vmatpush1.msra.mxu0 %v228
      %750 = vmatprep.subr.mxu0 0.0
      %751 = vmatpush1.msra.mxu0 0.0
      %752 = vmatprep.subr.mxu0 0.0
      %753 = vmatpush1.msra.mxu0 0.0
      %754 = vmatprep.subr.mxu0 0.0
      %755 = vmatpush1.msra.mxu0 0.0
      %756 = vmatprep.subr.mxu0 0.0
      %757 = vmatpush1.msra.mxu0 0.0
      %758 = vmatprep.subr.mxu0 0.0
      %759 = vmatpush1.msra.mxu0 0.0
      %760 = vmatprep.subr.mxu0 0.0
      %761 = vmatpush1.msra.mxu0 0.0
      %762 = vmatprep.subr.mxu0 0.0
      %763 = vmatpush1.msra.mxu0 0.0
      %764 = vmatprep.subr.mxu0 0.0
      %765 = vmatpush1.msra.mxu0 0.0
      %766 = vmatprep.subr.mxu0 0.0
      %767 = vmatpush1.msra.mxu0 0.0
      %768 = vmatprep.subr.mxu0 0.0
      %769 = vmatpush1.msra.mxu0 0.0
      %770 = vmatprep.subr.mxu0 0.0
      %771 = vmatpush1.msra.mxu0 0.0
      %772 = vmatprep.subr.mxu0 0.0
      %773 = vmatpush1.msra.mxu0 0.0
      %774 = vmatprep.subr.mxu0 0.0
      %775 = vmatpush1.msra.mxu0 0.0
      %776 = vmatprep.subr.mxu0 0.0
      %777 = vmatpush1.msra.mxu0 0.0
      %778 = vmatprep.subr.mxu0 0.0
      %779 = vmatpush1.msra.mxu0 0.0
      %780 = vmatprep.subr.mxu0 0.0
      %781 = vmatpush1.msra.mxu0 0.0
      %782 = vmatprep.subr.mxu0 0.0
      %783 = vmatpush1.msra.mxu0 0.0
      %784 = vmatprep.subr.mxu0 0.0
      %785 = vmatpush1.msra.mxu0 0.0
      %786 = vmatprep.subr.mxu0 0.0
      %787 = vmatpush1.msra.mxu0 0.0
      %788 = vmatprep.subr.mxu0 0.0
      %789 = vmatpush1.msra.mxu0 0.0
      %790 = vmatprep.subr.mxu0 0.0
      %791 = vmatpush1.msra.mxu0 0.0
      %792 = vmatprep.subr.mxu0 0.0
      %793 = vmatpush1.msra.mxu0 0.0
      %794 = vmatprep.subr.mxu0 0.0
      %795 = vmatpush1.msra.mxu0 0.0
      %796 = vmatprep.subr.mxu0 0.0
      %797 = vmatpush1.msra.mxu0 0.0
      %798 = vmatprep.subr.mxu0 0.0
      %799 = vmatpush1.msra.mxu0 0.0
      %800 = vmatprep.subr.mxu0 0.0
      %801 = vmatpush1.msra.mxu0 0.0
      %802 = vmatprep.subr.mxu0 0.0
      %803 = vmatpush1.msra.mxu0 0.0
      %804 = vmatprep.subr.mxu0 0.0
      %805 = vmatpush1.msra.mxu0 0.0
      %806 = vmatprep.subr.mxu0 0.0
      %807 = vmatpush1.msra.mxu0 0.0
      %808 = vmatprep.subr.mxu0 0.0
      %809 = vmatpush1.msra.mxu0 0.0
      %810 = vmatprep.mubr.f32.mxu0 0.0
      %811 = vmatmul.mubr.f32.gmra.mrb[0].mxu0 %v744
      %v812 = vpop.f32.mrb[0].mxu0
      %v813 = vadd.f32 0.0, %v812
      %v814 = vpop.f32.mrb[0].mxu0
      %815 = vdwg.mxu0
      %v817 = vsel %vm552, %v596, 0
      %819 = vmatprep.subr.mxu0 0.0
      %820 = vmatpush1.msra.mxu0 %v229
      %821 = vmatprep.subr.mxu0 0.0
      %822 = vmatpush1.msra.mxu0 %v230
      %823 = vmatprep.subr.mxu0 0.0
      %824 = vmatpush1.msra.mxu0 0.0
      %825 = vmatprep.subr.mxu0 0.0
      %826 = vmatpush1.msra.mxu0 0.0
      %827 = vmatprep.subr.mxu0 0.0
      %828 = vmatpush1.msra.mxu0 0.0
      %829 = vmatprep.subr.mxu0 0.0
      %830 = vmatpush1.msra.mxu0 0.0
      %831 = vmatprep.subr.mxu0 0.0
      %832 = vmatpush1.msra.mxu0 0.0
      %833 = vmatprep.subr.mxu0 0.0
      %834 = vmatpush1.msra.mxu0 0.0
      %835 = vmatprep.subr.mxu0 0.0
      %836 = vmatpush1.msra.mxu0 0.0
      %837 = vmatprep.subr.mxu0 0.0
      %838 = vmatpush1.msra.mxu0 0.0
      %839 = vmatprep.subr.mxu0 0.0
      %840 = vmatpush1.msra.mxu0 0.0
      %841 = vmatprep.subr.mxu0 0.0
      %842 = vmatpush1.msra.mxu0 0.0
      %843 = vmatprep.subr.mxu0 0.0
      %844 = vmatpush1.msra.mxu0 0.0
      %845 = vmatprep.subr.mxu0 0.0
      %846 = vmatpush1.msra.mxu0 0.0
      %847 = vmatprep.subr.mxu0 0.0
      %848 = vmatpush1.msra.mxu0 0.0
      %849 = vmatprep.subr.mxu0 0.0
      %850 = vmatpush1.msra.mxu0 0.0
      %851 = vmatprep.subr.mxu0 0.0
      %852 = vmatpush1.msra.mxu0 0.0
      %853 = vmatprep.subr.mxu0 0.0
      %854 = vmatpush1.msra.mxu0 0.0
      %855 = vmatprep.subr.mxu0 0.0
      %856 = vmatpush1.msra.mxu0 0.0
      %857 = vmatprep.subr.mxu0 0.0
      %858 = vmatpush1.msra.mxu0 0.0
      %859 = vmatprep.subr.mxu0 0.0
      %860 = vmatpush1.msra.mxu0 0.0
      %861 = vmatprep.subr.mxu0 0.0
      %862 = vmatpush1.msra.mxu0 0.0
      %863 = vmatprep.subr.mxu0 0.0
      %864 = vmatpush1.msra.mxu0 0.0
      %865 = vmatprep.subr.mxu0 0.0
      %866 = vmatpush1.msra.mxu0 0.0
      %867 = vmatprep.subr.mxu0 0.0
      %868 = vmatpush1.msra.mxu0 0.0
      %869 = vmatprep.subr.mxu0 0.0
      %870 = vmatpush1.msra.mxu0 0.0
      %871 = vmatprep.subr.mxu0 0.0
      %872 = vmatpush1.msra.mxu0 0.0
      %873 = vmatprep.subr.mxu0 0.0
      %874 = vmatpush1.msra.mxu0 0.0
      %875 = vmatprep.subr.mxu0 0.0
      %876 = vmatpush1.msra.mxu0 0.0
      %877 = vmatprep.subr.mxu0 0.0
      %878 = vmatpush1.msra.mxu0 0.0
      %879 = vmatprep.subr.mxu0 0.0
      %880 = vmatpush1.msra.mxu0 0.0
      %881 = vmatprep.subr.mxu0 0.0
      %882 = vmatpush1.msra.mxu0 0.0
      %883 = vmatprep.mubr.f32.mxu0 0.0
      %884 = vmatmul.mubr.f32.gmra.mrb[0].mxu0 %v817
      %v885 = vpop.f32.mrb[0].mxu0
      %v886 = vadd.f32 0.0, %v885
      %v887 = vpop.f32.mrb[0].mxu0
      %888 = vdwg.mxu0
      %889 = vst.msk [vmem:[%s210] sm:$0xff] %vm231, %v667
      %890 = vst.msk [vmem:[%s210 + $0x8] sm:$0xff] %vm231, %v740
      %891 = vst.msk [vmem:[%s210 + $0x10] sm:$0xff] %vm231, %v813
      %892 = vst.msk [vmem:[%s210 + $0x18] sm:$0xff] %vm231, %v886
      %p893 = scmp.lt.s32.totalorder %s14, 1
      %s894 = scalar_select %p893, %s14, 1
      %s895 = smul.addr %s894, 4
      %s896 = smul.addr %s895, 8
      %s897 = scalar_lea.vmem %s3, %s896
      // Predicated region
      $region33: #{cross_attention.8} parent=31 // pred_check
        %p898 = pneg %p110
      $region34: #{cross_attention.8} parent=31 // pred_check_branch
        %900 = sbr.rel (%p898) target = $region36
      $region35: #{cross_attention.8} parent=31 // pred_region
        _
      $region36: #{cross_attention.8} parent=31 // pred_fallthru
        _
    $region32: #{cross_attention.8} parent=5 // pred_fallthru
      _
    %p901 = scmp.le.s32.totalorder 2, %s9
    // Predicated region
    $region37: #{cross_attention.8} parent=5 // pred_check
      %p902 = pneg %p901
    $region38: #{cross_attention.8} parent=5 // pred_check_branch
      %904 = sbr.rel (%p902) target = $region40
    $region39: #{cross_attention.8} parent=5 // pred_region
      %s905 = ssub.s32 %s9, 2
      // Predicated region
      $region41: #{cross_attention.8} parent=39 // pred_check
        %p906 = pneg %p116
      $region42: #{cross_attention.8} parent=39 // pred_check_branch
        %908 = sbr.rel (%p906) target = $region44
      $region43: #{cross_attention.8} parent=39 // pred_region
        %p909 = scmp.lt.s32.totalorder %s15, 1
        %s910 = scalar_select %p909, %s15, 1
        %s911 = smul.addr %s910, 4
        %s912 = smul.addr %s911, 8
        %s913 = scalar_lea.vmem %s3, %s912
      $region44: #{cross_attention.8} parent=39 // pred_fallthru
        _
    $region40: #{cross_attention.8} parent=5 // pred_fallthru
      _
  $region6: #{cross_attention.8} parent=0 // loop_footer
    %s13 = sadd.s32 1, %s9
  $region7: #{cross_attention.8} parent=0 // loop_footer_branch
    %8 = sbr.rel target = $region3
  $region8: #{cross_attention.8} parent=0 // loop_exit
    _

</llo_original>
